<compile_context>
chip_gen: v7x
topology: tpu7x:2x2x1
jax: 0.10.0
libtpu: 0.0.40
codegen_flags: <defaults>
</compile_context>

<pallas_src>
import functools

import jax
import jax.numpy as jnp
from jax.experimental import pallas as pl
from jax.experimental.pallas import tpu as pltpu


def _round_up(x, m):
    return ((x + m - 1) // m) * m


# ------------------------- fused tiled linear kernel ------------------------ #

def _linear_kernel(x_ref, w_ref, b_ref, o_ref, *, leaky):
    # bf16 operands, f32 accumulation on the MXU.
    y = jnp.dot(x_ref[...], w_ref[...], preferred_element_type=jnp.float32)
    y = y + b_ref[...]
    if leaky:  # LeakyReLU(negative_slope=0.1), matching supar's MLP activation
        y = jnp.where(y > 0, y, 0.1 * y)
    o_ref[...] = y.astype(o_ref.dtype)


def pallas_linear(x2d, w, b, leaky=False, out_dtype=jnp.float32, block_m=512):
    """y = act(x2d @ w + b). x2d: (M, K), w: (K, N), b: (N,).

    Row-tiled over M (grid, double-buffered, "parallel"), weight resident,
    K/N zero-padded to 128 for lane-dense MXU work, bf16-in / f32-acc.
    """
    M, K = x2d.shape
    Kw, N = w.shape
    assert K == Kw

    Mp = _round_up(M, 16)          # bf16-friendly sublane multiple
    Kp = _round_up(K, 128)
    Np = _round_up(N, 128)
    tm = min(block_m, Mp)
    Mp = _round_up(Mp, tm)

    xb = jnp.zeros((Mp, Kp), jnp.bfloat16).at[:M, :K].set(x2d.astype(jnp.bfloat16))
    wb = jnp.zeros((Kp, Np), jnp.bfloat16).at[:K, :N].set(w.astype(jnp.bfloat16))
    bb = jnp.zeros((1, Np), jnp.float32).at[0, :N].set(b.astype(jnp.float32))

    out = pl.pallas_call(
        functools.partial(_linear_kernel, leaky=leaky),
        out_shape=jax.ShapeDtypeStruct((Mp, Np), out_dtype),
        grid=(Mp // tm,),
        in_specs=[
            pl.BlockSpec((tm, Kp), lambda i: (i, 0)),
            pl.BlockSpec((Kp, Np), lambda i: (0, 0)),   # weight stays resident
            pl.BlockSpec((1, Np), lambda i: (0, 0)),
        ],
        out_specs=pl.BlockSpec((tm, Np), lambda i: (i, 0)),
        compiler_params=pltpu.CompilerParams(
            dimension_semantics=("parallel",)),
    )(xb, wb, bb)
    return out[:M, :N]


# ----------------------------- biaffine scores ------------------------------ #

def _biaffine_kernel(t_ref, r_ref, o_ref):
    # s[b] = t[b] @ r[b]^T, contracting the feature axes (no explicit transpose).
    o_ref[0] = jax.lax.dot_general(
        t_ref[0], r_ref[0], (((1,), (1,)), ((), ())),
        preferred_element_type=jnp.float32)


def pallas_biaffine_scores(t, r):
    """s[b] = t[b] @ r[b]^T -> (B, L, L).  t, r: (B, L, D)."""
    B, L, D = t.shape
    Lp = _round_up(L, 128)   # lane-dense output stores
    Dp = _round_up(D, 128)
    tp = jnp.zeros((B, Lp, Dp), jnp.bfloat16).at[:, :L, :D].set(
        t.astype(jnp.bfloat16))
    rp = jnp.zeros((B, Lp, Dp), jnp.bfloat16).at[:, :L, :D].set(
        r.astype(jnp.bfloat16))
    out = pl.pallas_call(
        _biaffine_kernel,
        out_shape=jax.ShapeDtypeStruct((B, Lp, Lp), jnp.float32),
        grid=(B,),
        in_specs=[
            pl.BlockSpec((1, Lp, Dp), lambda b: (b, 0, 0)),
            pl.BlockSpec((1, Lp, Dp), lambda b: (b, 0, 0)),
        ],
        out_specs=pl.BlockSpec((1, Lp, Lp), lambda b: (b, 0, 0)),
        compiler_params=pltpu.CompilerParams(
            dimension_semantics=("parallel",)),
    )(tp, rp)
    return out[:, :L, :L]


# --------------------------- BiLSTM recurrence ------------------------------ #

def _bilstm_rec_kernel(gxf_ref, gxb_ref, whf_ref, whb_ref,
                       of_ref, ob_ref, hf, cf, hb, cb):
    @pl.when(pl.program_id(0) == 0)
    def _():
        hf[...] = jnp.zeros_like(hf)
        cf[...] = jnp.zeros_like(cf)
        hb[...] = jnp.zeros_like(hb)
        cb[...] = jnp.zeros_like(cb)

    H = hf.shape[-1]

    def cell(gx, h_ref, c_ref, w_ref):
        # gx already contains x@w_ih + b_ih + b_hh (f32).
        g = gx + jnp.dot(h_ref[...].astype(jnp.bfloat16), w_ref[...],
                         preferred_element_type=jnp.float32)
        # PyTorch gate order: i, f, g, o. Elementwise math stays in f32;
        # sigmoid/tanh go to the EUP (separate bundle slot).
        i = jax.nn.sigmoid(g[:, :H])
        f = jax.nn.sigmoid(g[:, H:2 * H])
        gg = jnp.tanh(g[:, 2 * H:3 * H])
        o = jax.nn.sigmoid(g[:, 3 * H:])
        c = f * c_ref[...] + i * gg
        h = o * jnp.tanh(c)
        c_ref[...] = c
        h_ref[...] = h
        return h

    of_ref[0] = cell(gxf_ref[0], hf, cf, whf_ref)
    ob_ref[0] = cell(gxb_ref[0], hb, cb, whb_ref)


def pallas_bilstm_layer(x, layer):
    """One bidirectional LSTM layer. x: (B, S, Din) -> (B, S, 2H)."""
    B, S, Din = x.shape
    w_ih_f, b_ih_f, w_hh_f, b_hh_f = layer["fwd"]
    w_ih_b, b_ih_b, w_hh_b, b_hh_b = layer["bwd"]
    H = w_hh_f.shape[0]

    # Fused input projection for BOTH directions: one (Din, 8H) matmul,
    # b_hh folded into the bias so the recurrence only adds h @ w_hh.
    w_ih = jnp.concatenate([w_ih_f, w_ih_b], axis=1)               # (Din, 8H)
    bias = jnp.concatenate([b_ih_f + b_hh_f, b_ih_b + b_hh_b], 0)  # (8H,)
    gx = pallas_linear(x.reshape(B * S, Din), w_ih, bias)          # (B*S, 8H) f32
    gx = gx.reshape(B, S, 8 * H)

    # Time-major layout for the recurrence grid; backward direction sees
    # time-reversed inputs (state reset at grid step 0 for both directions).
    gxf = jnp.swapaxes(gx[..., :4 * H], 0, 1)            # (S, B, 4H)
    gxb = jnp.swapaxes(gx[..., 4 * H:], 0, 1)[::-1]      # reversed time

    hf, hb_rev = pl.pallas_call(
        _bilstm_rec_kernel,
        out_shape=(jax.ShapeDtypeStruct((S, B, H), jnp.float32),
                   jax.ShapeDtypeStruct((S, B, H), jnp.float32)),
        grid=(S,),
        in_specs=[
            pl.BlockSpec((1, B, 4 * H), lambda t: (t, 0, 0)),
            pl.BlockSpec((1, B, 4 * H), lambda t: (t, 0, 0)),
            pl.BlockSpec((H, 4 * H), lambda t: (0, 0)),   # w_hh resident in VMEM
            pl.BlockSpec((H, 4 * H), lambda t: (0, 0)),
        ],
        out_specs=(
            pl.BlockSpec((1, B, H), lambda t: (t, 0, 0)),
            pl.BlockSpec((1, B, H), lambda t: (t, 0, 0)),
        ),
        scratch_shapes=[pltpu.VMEM((B, H), jnp.float32) for _ in range(4)],
        compiler_params=pltpu.CompilerParams(
            dimension_semantics=("arbitrary",)),
    )(gxf, gxb,
      w_hh_f.astype(jnp.bfloat16), w_hh_b.astype(jnp.bfloat16))

    hf = jnp.swapaxes(hf, 0, 1)                    # (B, S, H)
    hb = jnp.swapaxes(hb_rev[::-1], 0, 1)          # (B, S, H)
    return jnp.concatenate([hf, hb], axis=-1)      # [forward | backward]


# ------------------------------ Model forward ------------------------------ #

def model_forward(chars, params):
    B, S = chars.shape
    # nn.Embedding lookup (glue gather). embed_dropout is identity at inference.
    embed = params["char_embed"][chars]                      # (B, S, E)

    x = embed
    for layer in params["lstm"]:
        x = pallas_bilstm_layer(x, layer)                    # (B, S, 2H)
    H = x.shape[-1] // 2
    x_f, x_b = x[..., :H], x[..., H:]

    # fencepost features: cat(x_f[:, :-1], x_b[:, 1:])
    xc = jnp.concatenate([x_f[:, :-1], x_b[:, 1:]], axis=-1)  # (B, S-1, 2H)
    Bc, L, Dc = xc.shape
    flat = xc.reshape(Bc * L, Dc)

    # Fused span_l / span_r MLP (one wide matmul, LeakyReLU 0.1).
    n_mlp = params["mlp_l_w"].shape[1]
    w_lr = jnp.concatenate([params["mlp_l_w"], params["mlp_r_w"]], axis=1)
    b_lr = jnp.concatenate([params["mlp_l_b"], params["mlp_r_b"]], axis=0)
    span = pallas_linear(flat, w_lr, b_lr, leaky=True, out_dtype=jnp.bfloat16)
    span_l = span[:, :n_mlp]                                  # (B*L, n_mlp)
    span_r = span[:, n_mlp:].reshape(Bc, L, n_mlp)            # (B, L, n_mlp)

    # Biaffine(bias_x=True, bias_y=False, n_out=1):
    #   s[b] = ([span_l[b], 1] @ W) @ span_r[b]^T
    # Hoist the projection: t = span_l @ W[:D] + W[D] (ones-column -> bias row),
    # done as one tiled linear over the flattened batch.
    Wb = params["biaffine_w"]                                 # (n_mlp+1, n_mlp)
    t = pallas_linear(span_l, Wb[:n_mlp], Wb[n_mlp],
                      out_dtype=jnp.bfloat16).reshape(Bc, L, n_mlp)
    s_span = pallas_biaffine_scores(t, span_r)                # (B, L, L) f32
    return s_span, None


# --------------------------- Pure-JAX reference ------------------------------ #

def reference_forward(chars, params):
    embed = params["char_embed"][chars]
    x = embed
    for layer in params["lstm"]:
        B, S, Din = x.shape
        outs = []
        for d, rev in (("fwd", False), ("bwd", True)):
            w_ih, b_ih, w_hh, b_hh = layer[d]
            H = w_hh.shape[0]
            xs = x[:, ::-1] if rev else x

            def step(carry, xt, w_ih=w_ih, b_ih=b_ih, w_hh=w_hh, b_hh=b_hh, H=H):
                h, c = carry
                g = xt @ w_ih + b_ih + h @ w_hh + b_hh
                i = jax.nn.sigmoid(g[:, :H])
                f = jax.nn.sigmoid(g[:, H:2 * H])
                gg = jnp.tanh(g[:, 2 * H:3 * H])
                o = jax.nn.sigmoid(g[:, 3 * H:])
                c = f * c + i * gg
                h = o * jnp.tanh(c)
                return (h, c), h

            init = (jnp.zeros((B, H), jnp.float32), jnp.zeros((B, H), jnp.float32))
            _, hs = jax.lax.scan(step, init, jnp.swapaxes(xs, 0, 1))
            hs = jnp.swapaxes(hs, 0, 1)
            if rev:
                hs = hs[:, ::-1]
            outs.append(hs)
        x = jnp.concatenate(outs, -1)
    H2 = x.shape[-1] // 2
    x_f, x_b = x[..., :H2], x[..., H2:]
    xc = jnp.concatenate([x_f[:, :-1], x_b[:, 1:]], -1)

    def leaky(v):
        return jnp.where(v > 0, v, 0.1 * v)

    span_l = leaky(xc @ params["mlp_l_w"] + params["mlp_l_b"])
    span_r = leaky(xc @ params["mlp_r_w"] + params["mlp_r_b"])
    n = span_l.shape[-1]
    t = span_l @ params["biaffine_w"][:n] + params["biaffine_w"][n]
    return jnp.einsum("bxd,byd->bxy", t, span_r)


# ------------------------------ Param init ---------------------------------- #

def init_params(key, n_chars, n_embed, n_hidden, n_layers, n_mlp):
    n_keys = 1 + n_layers * 8 + 5
    ks = iter(jax.random.split(key, n_keys))

    def rnd(shape, scale=0.1):
        return scale * jax.random.normal(next(ks), shape, jnp.float32)

    params = {"char_embed": rnd((n_chars, n_embed))}
    lstm = []
    din = n_embed
    for _ in range(n_layers):
        layer = {}
        for d in ("fwd", "bwd"):
            layer[d] = (
                rnd((din, 4 * n_hidden)),       # w_ih
                rnd((4 * n_hidden,)),           # b_ih
                rnd((n_hidden, 4 * n_hidden)),  # w_hh
                rnd((4 * n_hidden,)),           # b_hh
            )
        lstm.append(layer)
        din = 2 * n_hidden
    params["lstm"] = lstm
    params["mlp_l_w"] = rnd((2 * n_hidden, n_mlp))
    params["mlp_l_b"] = rnd((n_mlp,))
    params["mlp_r_w"] = rnd((2 * n_hidden, n_mlp))
    params["mlp_r_b"] = rnd((n_mlp,))
    params["biaffine_w"] = rnd((n_mlp + 1, n_mlp))   # (n_in + bias_x, n_in)
    return params


# ---------------------------------- Main ------------------------------------ #

if __name__ == "__main__":
    n_chars, n_embed, n_hidden, n_layers, n_mlp = 100, 32, 32, 2, 32
    B, S = 2, 8

    params = init_params(jax.random.PRNGKey(0), n_chars, n_embed, n_hidden,
                         n_layers, n_mlp)
    # chars in [1, n_chars) -> no pad tokens, so lens == seq_len for all rows.
    chars = jax.random.randint(jax.random.PRNGKey(1), (B, S), 1, n_chars)

    forward = jax.jit(model_forward)
    s_span, s_label = forward(chars, params)
    s_span = jax.block_until_ready(s_span)

    assert s_span.shape == (B, S - 1, S - 1)
    assert s_label is None
    assert bool(jnp.all(jnp.isfinite(s_span)))

    # Numerical check vs. an f32 pure-JAX reference (kernel uses bf16 MXU
    # operands, so allow a generous mixed-precision tolerance).
    ref = jax.block_until_ready(reference_forward(chars, params))
    max_err = float(jnp.max(jnp.abs(s_span - ref)))
    max_ref = float(jnp.max(jnp.abs(ref)))
    assert max_err < 1e-2 + 5e-2 * max_ref, (max_err, max_ref)

    print("KERNEL_OK")
</pallas_src>

<mosaic_0001>
module attributes {stable_mosaic.version = 11 : i64} {
  func.func @_linear_kernel(%arg0: i32, %arg1: memref<16x128xbf16, #tpu.memory_space<vmem>>, %arg2: memref<128x256xbf16, #tpu.memory_space<vmem>>, %arg3: memref<1x256xf32, #tpu.memory_space<vmem>>, %arg4: memref<16x256xf32, #tpu.memory_space<vmem>>) attributes {dimension_semantics = [#tpu.dimension_semantics<parallel>], iteration_bounds = array<i64: 1>, scalar_prefetch = 0 : i64, scratch_operands = 0 : i64, tpu.core_type = #tpu.core_type<tc>, window_params = [{transform_indices = @transform_0, window_bounds = array<i64: 16, 128>}, {pipeline_mode = #tpu.pipeline_mode<synchronous>, transform_indices = @transform_1, window_bounds = array<i64: 128, 256>}, {pipeline_mode = #tpu.pipeline_mode<synchronous>, transform_indices = @transform_2, window_bounds = array<i64: 1, 256>}, {transform_indices = @transform_3, window_bounds = array<i64: 16, 256>}]} {
    %c0 = arith.constant 0 : index
    %c0_0 = arith.constant 0 : index
    %0 = vector.load %arg1[%c0, %c0_0] : memref<16x128xbf16, #tpu.memory_space<vmem>>, vector<16x128xbf16>
    %c0_1 = arith.constant 0 : index
    %c0_2 = arith.constant 0 : index
    %1 = vector.load %arg2[%c0_1, %c0_2] : memref<128x256xbf16, #tpu.memory_space<vmem>>, vector<128x256xbf16>
    %cst = arith.constant dense<0.000000e+00> : vector<16x256xf32>
    %2 = tpu.matmul %0, %1, %cst {dimension_numbers = #tpu.dot_dimension_numbers<[1], [0], [0], [1], [0, 0, 1, 1], [], []>} : vector<16x128xbf16>, vector<128x256xbf16>, vector<16x256xf32> -> vector<16x256xf32>
    %c0_3 = arith.constant 0 : index
    %c0_4 = arith.constant 0 : index
    %3 = vector.load %arg3[%c0_3, %c0_4] : memref<1x256xf32, #tpu.memory_space<vmem>>, vector<1x256xf32>
    %4 = vector.broadcast %3 : vector<1x256xf32> to vector<16x256xf32>
    %5 = arith.addf %2, %4 : vector<16x256xf32>
    %c0_5 = arith.constant 0 : index
    %c0_6 = arith.constant 0 : index
    %6 = vector.load %arg4[%c0_5, %c0_6] : memref<16x256xf32, #tpu.memory_space<vmem>>, vector<16x256xf32>
    tpu.vector_store %arg4[%c0_5, %c0_6], %5 {strides = array<i32>} : memref<16x256xf32, #tpu.memory_space<vmem>>, vector<16x256xf32>,
    return
  }
  func.func @transform_0(%arg0: i32) -> (i32, i32) {
    %c0_i32 = arith.constant 0 : i32
    %c0_i32_0 = arith.constant 0 : i32
    return %arg0, %c0_i32 : i32, i32
  }
  func.func @transform_1(%arg0: i32) -> (i32, i32) {
    %c0_i32 = arith.constant 0 : i32
    %c0_i32_0 = arith.constant 0 : i32
    %c0_i32_1 = arith.constant 0 : i32
    return %c0_i32, %c0_i32_0 : i32, i32
  }
  func.func @transform_2(%arg0: i32) -> (i32, i32) {
    %c0_i32 = arith.constant 0 : i32
    %c0_i32_0 = arith.constant 0 : i32
    %c0_i32_1 = arith.constant 0 : i32
    return %c0_i32, %c0_i32_0 : i32, i32
  }
  func.func @transform_3(%arg0: i32) -> (i32, i32) {
    %c0_i32 = arith.constant 0 : i32
    %c0_i32_0 = arith.constant 0 : i32
    return %arg0, %c0_i32 : i32, i32
  }
}

module attributes {stable_mosaic.version = 11 : i64} {
  func.func @_bilstm_rec_kernel(%arg0: i32, %arg1: memref<1x2x128xf32, #tpu.memory_space<vmem>>, %arg2: memref<1x2x128xf32, #tpu.memory_space<vmem>>, %arg3: memref<32x128xbf16, #tpu.memory_space<vmem>>, %arg4: memref<32x128xbf16, #tpu.memory_space<vmem>>, %arg5: memref<1x2x32xf32, #tpu.memory_space<vmem>>, %arg6: memref<1x2x32xf32, #tpu.memory_space<vmem>>, %arg7: memref<2x32xf32, #tpu.memory_space<vmem>>, %arg8: memref<2x32xf32, #tpu.memory_space<vmem>>, %arg9: memref<2x32xf32, #tpu.memory_space<vmem>>, %arg10: memref<2x32xf32, #tpu.memory_space<vmem>>) attributes {dimension_semantics = [#tpu.dimension_semantics<arbitrary>], iteration_bounds = array<i64: 8>, scalar_prefetch = 0 : i64, scratch_operands = 4 : i64, tpu.core_type = #tpu.core_type<tc>, window_params = [{transform_indices = @transform_0, window_bounds = array<i64: 1, 2, 128>}, {transform_indices = @transform_1, window_bounds = array<i64: 1, 2, 128>}, {pipeline_mode = #tpu.pipeline_mode<synchronous>, transform_indices = @transform_2, window_bounds = array<i64: 32, 128>}, {pipeline_mode = #tpu.pipeline_mode<synchronous>, transform_indices = @transform_3, window_bounds = array<i64: 32, 128>}, {transform_indices = @transform_4, window_bounds = array<i64: 1, 2, 32>}, {transform_indices = @transform_5, window_bounds = array<i64: 1, 2, 32>}]} {
    %c0_i32 = arith.constant 0 : i32
    %0 = arith.cmpi eq, %arg0, %c0_i32 : i32
    %1 = arith.extui %0 : i1 to i32
    %c0_i32_0 = arith.constant 0 : i32
    %2 = arith.cmpi ne, %1, %c0_i32_0 : i32
    scf.if %2 {
      %cst_39 = arith.constant 0.000000e+00 : f32
      %79 = vector.broadcast %cst_39 : f32 to vector<2x32xf32>
      %c0_40 = arith.constant 0 : index
      %c0_41 = arith.constant 0 : index
      %80 = vector.load %arg7[%c0_40, %c0_41] : memref<2x32xf32, #tpu.memory_space<vmem>>, vector<2x32xf32>
      tpu.vector_store %arg7[%c0_40, %c0_41], %79 {strides = array<i32>} : memref<2x32xf32, #tpu.memory_space<vmem>>, vector<2x32xf32>,
      %cst_42 = arith.constant 0.000000e+00 : f32
      %81 = vector.broadcast %cst_42 : f32 to vector<2x32xf32>
      %c0_43 = arith.constant 0 : index
      %c0_44 = arith.constant 0 : index
      %82 = vector.load %arg8[%c0_43, %c0_44] : memref<2x32xf32, #tpu.memory_space<vmem>>, vector<2x32xf32>
      tpu.vector_store %arg8[%c0_43, %c0_44], %81 {strides = array<i32>} : memref<2x32xf32, #tpu.memory_space<vmem>>, vector<2x32xf32>,
      %cst_45 = arith.constant 0.000000e+00 : f32
      %83 = vector.broadcast %cst_45 : f32 to vector<2x32xf32>
      %c0_46 = arith.constant 0 : index
      %c0_47 = arith.constant 0 : index
      %84 = vector.load %arg9[%c0_46, %c0_47] : memref<2x32xf32, #tpu.memory_space<vmem>>, vector<2x32xf32>
      tpu.vector_store %arg9[%c0_46, %c0_47], %83 {strides = array<i32>} : memref<2x32xf32, #tpu.memory_space<vmem>>, vector<2x32xf32>,
      %cst_48 = arith.constant 0.000000e+00 : f32
      %85 = vector.broadcast %cst_48 : f32 to vector<2x32xf32>
      %c0_49 = arith.constant 0 : index
      %c0_50 = arith.constant 0 : index
      %86 = vector.load %arg10[%c0_49, %c0_50] : memref<2x32xf32, #tpu.memory_space<vmem>>, vector<2x32xf32>
      tpu.vector_store %arg10[%c0_49, %c0_50], %85 {strides = array<i32>} : memref<2x32xf32, #tpu.memory_space<vmem>>, vector<2x32xf32>,
    } else {
    }
    %c0 = arith.constant 0 : index
    %c0_1 = arith.constant 0 : index
    %c0_2 = arith.constant 0 : index
    %3 = vector.load %arg1[%c0, %c0_1, %c0_2] : memref<1x2x128xf32, #tpu.memory_space<vmem>>, vector<1x2x128xf32>
    %4 = vector.shape_cast %3 : vector<1x2x128xf32> to vector<2x128xf32>
    %c0_3 = arith.constant 0 : index
    %c0_4 = arith.constant 0 : index
    %5 = vector.load %arg7[%c0_3, %c0_4] : memref<2x32xf32, #tpu.memory_space<vmem>>, vector<2x32xf32>
    %6 = arith.truncf %5 : vector<2x32xf32> to vector<2x32xbf16>
    %c0_5 = arith.constant 0 : index
    %c0_6 = arith.constant 0 : index
    %7 = vector.load %arg3[%c0_5, %c0_6] : memref<32x128xbf16, #tpu.memory_space<vmem>>, vector<32x128xbf16>
    %cst = arith.constant dense<0.000000e+00> : vector<2x128xf32>
    %8 = tpu.matmul %6, %7, %cst {dimension_numbers = #tpu.dot_dimension_numbers<[1], [0], [0], [1], [0, 0, 1, 1], [], []>} : vector<2x32xbf16>, vector<32x128xbf16>, vector<2x128xf32> -> vector<2x128xf32>
    %9 = arith.addf %4, %8 : vector<2x128xf32>
    %10 = vector.extract_strided_slice %9 {offsets = [0, 0], sizes = [2, 32], strides = [1, 1]} : vector<2x128xf32> to vector<2x32xf32>
    %11 = arith.negf %10 : vector<2x32xf32>
    %12 = math.exp %11 : vector<2x32xf32>
    %cst_7 = arith.constant 1.000000e+00 : f32
    %13 = vector.broadcast %cst_7 : f32 to vector<2x32xf32>
    %14 = arith.addf %13, %12 : vector<2x32xf32>
    %15 = arith.divf %13, %14 : vector<2x32xf32>
    %16 = vector.extract_strided_slice %9 {offsets = [0, 32], sizes = [2, 32], strides = [1, 1]} : vector<2x128xf32> to vector<2x32xf32>
    %17 = arith.negf %16 : vector<2x32xf32>
    %18 = math.exp %17 : vector<2x32xf32>
    %cst_8 = arith.constant 1.000000e+00 : f32
    %19 = vector.broadcast %cst_8 : f32 to vector<2x32xf32>
    %20 = arith.addf %19, %18 : vector<2x32xf32>
    %21 = arith.divf %19, %20 : vector<2x32xf32>
    %22 = vector.extract_strided_slice %9 {offsets = [0, 64], sizes = [2, 32], strides = [1, 1]} : vector<2x128xf32> to vector<2x32xf32>
    %23 = math.tanh %22 : vector<2x32xf32>
    %24 = vector.extract_strided_slice %9 {offsets = [0, 96], sizes = [2, 32], strides = [1, 1]} : vector<2x128xf32> to vector<2x32xf32>
    %25 = arith.negf %24 : vector<2x32xf32>
    %26 = math.exp %25 : vector<2x32xf32>
    %cst_9 = arith.constant 1.000000e+00 : f32
    %27 = vector.broadcast %cst_9 : f32 to vector<2x32xf32>
    %28 = arith.addf %27, %26 : vector<2x32xf32>
    %29 = arith.divf %27, %28 : vector<2x32xf32>
    %c0_10 = arith.constant 0 : index
    %c0_11 = arith.constant 0 : index
    %30 = vector.load %arg8[%c0_10, %c0_11] : memref<2x32xf32, #tpu.memory_space<vmem>>, vector<2x32xf32>
    %31 = arith.mulf %21, %30 : vector<2x32xf32>
    %32 = arith.mulf %15, %23 : vector<2x32xf32>
    %33 = arith.addf %31, %32 : vector<2x32xf32>
    %34 = math.tanh %33 : vector<2x32xf32>
    %35 = arith.mulf %29, %34 : vector<2x32xf32>
    %c0_12 = arith.constant 0 : index
    %c0_13 = arith.constant 0 : index
    %36 = vector.load %arg8[%c0_12, %c0_13] : memref<2x32xf32, #tpu.memory_space<vmem>>, vector<2x32xf32>
    tpu.vector_store %arg8[%c0_12, %c0_13], %33 {strides = array<i32>} : memref<2x32xf32, #tpu.memory_space<vmem>>, vector<2x32xf32>,
    %c0_14 = arith.constant 0 : index
    %c0_15 = arith.constant 0 : index
    %37 = vector.load %arg7[%c0_14, %c0_15] : memref<2x32xf32, #tpu.memory_space<vmem>>, vector<2x32xf32>
    tpu.vector_store %arg7[%c0_14, %c0_15], %35 {strides = array<i32>} : memref<2x32xf32, #tpu.memory_space<vmem>>, vector<2x32xf32>,
    %c0_16 = arith.constant 0 : index
    %c0_17 = arith.constant 0 : index
    %c0_18 = arith.constant 0 : index
    %38 = vector.load %arg5[%c0_16, %c0_17, %c0_18] : memref<1x2x32xf32, #tpu.memory_space<vmem>>, vector<1x2x32xf32>
    %39 = vector.shape_cast %38 : vector<1x2x32xf32> to vector<2x32xf32>
    %40 = vector.shape_cast %35 : vector<2x32xf32> to vector<1x2x32xf32>
    tpu.vector_store %arg5[%c0_16, %c0_17, %c0_18], %40 {strides = array<i32>} : memref<1x2x32xf32, #tpu.memory_space<vmem>>, vector<1x2x32xf32>,
    %c0_19 = arith.constant 0 : index
    %c0_20 = arith.constant 0 : index
    %c0_21 = arith.constant 0 : index
    %41 = vector.load %arg2[%c0_19, %c0_20, %c0_21] : memref<1x2x128xf32, #tpu.memory_space<vmem>>, vector<1x2x128xf32>
    %42 = vector.shape_cast %41 : vector<1x2x128xf32> to vector<2x128xf32>
    %c0_22 = arith.constant 0 : index
    %c0_23 = arith.constant 0 : index
    %43 = vector.load %arg9[%c0_22, %c0_23] : memref<2x32xf32, #tpu.memory_space<vmem>>, vector<2x32xf32>
    %44 = arith.truncf %43 : vector<2x32xf32> to vector<2x32xbf16>
    %c0_24 = arith.constant 0 : index
    %c0_25 = arith.constant 0 : index
    %45 = vector.load %arg4[%c0_24, %c0_25] : memref<32x128xbf16, #tpu.memory_space<vmem>>, vector<32x128xbf16>
    %cst_26 = arith.constant dense<0.000000e+00> : vector<2x128xf32>
    %46 = tpu.matmul %44, %45, %cst_26 {dimension_numbers = #tpu.dot_dimension_numbers<[1], [0], [0], [1], [0, 0, 1, 1], [], []>} : vector<2x32xbf16>, vector<32x128xbf16>, vector<2x128xf32> -> vector<2x128xf32>
    %47 = arith.addf %42, %46 : vector<2x128xf32>
    %48 = vector.extract_strided_slice %47 {offsets = [0, 0], sizes = [2, 32], strides = [1, 1]} : vector<2x128xf32> to vector<2x32xf32>
    %49 = arith.negf %48 : vector<2x32xf32>
    %50 = math.exp %49 : vector<2x32xf32>
    %cst_27 = arith.constant 1.000000e+00 : f32
    %51 = vector.broadcast %cst_27 : f32 to vector<2x32xf32>
    %52 = arith.addf %51, %50 : vector<2x32xf32>
    %53 = arith.divf %51, %52 : vector<2x32xf32>
    %54 = vector.extract_strided_slice %47 {offsets = [0, 32], sizes = [2, 32], strides = [1, 1]} : vector<2x128xf32> to vector<2x32xf32>
    %55 = arith.negf %54 : vector<2x32xf32>
    %56 = math.exp %55 : vector<2x32xf32>
    %cst_28 = arith.constant 1.000000e+00 : f32
    %57 = vector.broadcast %cst_28 : f32 to vector<2x32xf32>
    %58 = arith.addf %57, %56 : vector<2x32xf32>
    %59 = arith.divf %57, %58 : vector<2x32xf32>
    %60 = vector.extract_strided_slice %47 {offsets = [0, 64], sizes = [2, 32], strides = [1, 1]} : vector<2x128xf32> to vector<2x32xf32>
    %61 = math.tanh %60 : vector<2x32xf32>
    %62 = vector.extract_strided_slice %47 {offsets = [0, 96], sizes = [2, 32], strides = [1, 1]} : vector<2x128xf32> to vector<2x32xf32>
    %63 = arith.negf %62 : vector<2x32xf32>
    %64 = math.exp %63 : vector<2x32xf32>
    %cst_29 = arith.constant 1.000000e+00 : f32
    %65 = vector.broadcast %cst_29 : f32 to vector<2x32xf32>
    %66 = arith.addf %65, %64 : vector<2x32xf32>
    %67 = arith.divf %65, %66 : vector<2x32xf32>
    %c0_30 = arith.constant 0 : index
    %c0_31 = arith.constant 0 : index
    %68 = vector.load %arg10[%c0_30, %c0_31] : memref<2x32xf32, #tpu.memory_space<vmem>>, vector<2x32xf32>
    %69 = arith.mulf %59, %68 : vector<2x32xf32>
    %70 = arith.mulf %53, %61 : vector<2x32xf32>
    %71 = arith.addf %69, %70 : vector<2x32xf32>
    %72 = math.tanh %71 : vector<2x32xf32>
    %73 = arith.mulf %67, %72 : vector<2x32xf32>
    %c0_32 = arith.constant 0 : index
    %c0_33 = arith.constant 0 : index
    %74 = vector.load %arg10[%c0_32, %c0_33] : memref<2x32xf32, #tpu.memory_space<vmem>>, vector<2x32xf32>
    tpu.vector_store %arg10[%c0_32, %c0_33], %71 {strides = array<i32>} : memref<2x32xf32, #tpu.memory_space<vmem>>, vector<2x32xf32>,
    %c0_34 = arith.constant 0 : index
    %c0_35 = arith.constant 0 : index
    %75 = vector.load %arg9[%c0_34, %c0_35] : memref<2x32xf32, #tpu.memory_space<vmem>>, vector<2x32xf32>
    tpu.vector_store %arg9[%c0_34, %c0_35], %73 {strides = array<i32>} : memref<2x32xf32, #tpu.memory_space<vmem>>, vector<2x32xf32>,
    %c0_36 = arith.constant 0 : index
    %c0_37 = arith.constant 0 : index
    %c0_38 = arith.constant 0 : index
    %76 = vector.load %arg6[%c0_36, %c0_37, %c0_38] : memref<1x2x32xf32, #tpu.memory_space<vmem>>, vector<1x2x32xf32>
    %77 = vector.shape_cast %76 : vector<1x2x32xf32> to vector<2x32xf32>
    %78 = vector.shape_cast %73 : vector<2x32xf32> to vector<1x2x32xf32>
    tpu.vector_store %arg6[%c0_36, %c0_37, %c0_38], %78 {strides = array<i32>} : memref<1x2x32xf32, #tpu.memory_space<vmem>>, vector<1x2x32xf32>,
    return
  }
  func.func @transform_0(%arg0: i32) -> (i32, i32, i32) {
    %c0_i32 = arith.constant 0 : i32
    %c0_i32_0 = arith.constant 0 : i32
    %c0_i32_1 = arith.constant 0 : i32
    return %arg0, %c0_i32, %c0_i32_0 : i32, i32, i32
  }
  func.func @transform_1(%arg0: i32) -> (i32, i32, i32) {
    %c0_i32 = arith.constant 0 : i32
    %c0_i32_0 = arith.constant 0 : i32
    %c0_i32_1 = arith.constant 0 : i32
    return %arg0, %c0_i32, %c0_i32_0 : i32, i32, i32
  }
  func.func @transform_2(%arg0: i32) -> (i32, i32) {
    %c0_i32 = arith.constant 0 : i32
    %c0_i32_0 = arith.constant 0 : i32
    %c0_i32_1 = arith.constant 0 : i32
    return %c0_i32, %c0_i32_0 : i32, i32
  }
  func.func @transform_3(%arg0: i32) -> (i32, i32) {
    %c0_i32 = arith.constant 0 : i32
    %c0_i32_0 = arith.constant 0 : i32
    %c0_i32_1 = arith.constant 0 : i32
    return %c0_i32, %c0_i32_0 : i32, i32
  }
  func.func @transform_4(%arg0: i32) -> (i32, i32, i32) {
    %c0_i32 = arith.constant 0 : i32
    %c0_i32_0 = arith.constant 0 : i32
    %c0_i32_1 = arith.constant 0 : i32
    return %arg0, %c0_i32, %c0_i32_0 : i32, i32, i32
  }
  func.func @transform_5(%arg0: i32) -> (i32, i32, i32) {
    %c0_i32 = arith.constant 0 : i32
    %c0_i32_0 = arith.constant 0 : i32
    %c0_i32_1 = arith.constant 0 : i32
    return %arg0, %c0_i32, %c0_i32_0 : i32, i32, i32
  }
}

module attributes {stable_mosaic.version = 11 : i64} {
  func.func @_linear_kernel(%arg0: i32, %arg1: memref<16x128xbf16, #tpu.memory_space<vmem>>, %arg2: memref<128x128xbf16, #tpu.memory_space<vmem>>, %arg3: memref<1x128xf32, #tpu.memory_space<vmem>>, %arg4: memref<16x128xbf16, #tpu.memory_space<vmem>>) attributes {dimension_semantics = [#tpu.dimension_semantics<parallel>], iteration_bounds = array<i64: 1>, scalar_prefetch = 0 : i64, scratch_operands = 0 : i64, tpu.core_type = #tpu.core_type<tc>, window_params = [{transform_indices = @transform_0, window_bounds = array<i64: 16, 128>}, {pipeline_mode = #tpu.pipeline_mode<synchronous>, transform_indices = @transform_1, window_bounds = array<i64: 128, 128>}, {pipeline_mode = #tpu.pipeline_mode<synchronous>, transform_indices = @transform_2, window_bounds = array<i64: 1, 128>}, {transform_indices = @transform_3, window_bounds = array<i64: 16, 128>}]} {
    %c0 = arith.constant 0 : index
    %c0_0 = arith.constant 0 : index
    %0 = vector.load %arg1[%c0, %c0_0] : memref<16x128xbf16, #tpu.memory_space<vmem>>, vector<16x128xbf16>
    %c0_1 = arith.constant 0 : index
    %c0_2 = arith.constant 0 : index
    %1 = vector.load %arg2[%c0_1, %c0_2] : memref<128x128xbf16, #tpu.memory_space<vmem>>, vector<128x128xbf16>
    %cst = arith.constant dense<0.000000e+00> : vector<16x128xf32>
    %2 = tpu.matmul %0, %1, %cst {dimension_numbers = #tpu.dot_dimension_numbers<[1], [0], [0], [1], [0, 0, 1, 1], [], []>} : vector<16x128xbf16>, vector<128x128xbf16>, vector<16x128xf32> -> vector<16x128xf32>
    %c0_3 = arith.constant 0 : index
    %c0_4 = arith.constant 0 : index
    %3 = vector.load %arg3[%c0_3, %c0_4] : memref<1x128xf32, #tpu.memory_space<vmem>>, vector<1x128xf32>
    %4 = vector.broadcast %3 : vector<1x128xf32> to vector<16x128xf32>
    %5 = arith.addf %2, %4 : vector<16x128xf32>
    %cst_5 = arith.constant 0.000000e+00 : f32
    %6 = vector.broadcast %cst_5 : f32 to vector<16x128xf32>
    %7 = arith.cmpf ogt, %5, %6 : vector<16x128xf32>
    %cst_6 = arith.constant 1.000000e-01 : f32
    %8 = vector.broadcast %cst_6 : f32 to vector<16x128xf32>
    %9 = arith.mulf %8, %5 : vector<16x128xf32>
    %10 = arith.select %7, %5, %9 : vector<16x128xi1>, vector<16x128xf32>
    %11 = arith.truncf %10 : vector<16x128xf32> to vector<16x128xbf16>
    %c0_7 = arith.constant 0 : index
    %c0_8 = arith.constant 0 : index
    %12 = vector.load %arg4[%c0_7, %c0_8] : memref<16x128xbf16, #tpu.memory_space<vmem>>, vector<16x128xbf16>
    tpu.vector_store %arg4[%c0_7, %c0_8], %11 {strides = array<i32>} : memref<16x128xbf16, #tpu.memory_space<vmem>>, vector<16x128xbf16>,
    return
  }
  func.func @transform_0(%arg0: i32) -> (i32, i32) {
    %c0_i32 = arith.constant 0 : i32
    %c0_i32_0 = arith.constant 0 : i32
    return %arg0, %c0_i32 : i32, i32
  }
  func.func @transform_1(%arg0: i32) -> (i32, i32) {
    %c0_i32 = arith.constant 0 : i32
    %c0_i32_0 = arith.constant 0 : i32
    %c0_i32_1 = arith.constant 0 : i32
    return %c0_i32, %c0_i32_0 : i32, i32
  }
  func.func @transform_2(%arg0: i32) -> (i32, i32) {
    %c0_i32 = arith.constant 0 : i32
    %c0_i32_0 = arith.constant 0 : i32
    %c0_i32_1 = arith.constant 0 : i32
    return %c0_i32, %c0_i32_0 : i32, i32
  }
  func.func @transform_3(%arg0: i32) -> (i32, i32) {
    %c0_i32 = arith.constant 0 : i32
    %c0_i32_0 = arith.constant 0 : i32
    return %arg0, %c0_i32 : i32, i32
  }
}

module attributes {stable_mosaic.version = 11 : i64} {
  func.func @_biaffine_kernel(%arg0: i32, %arg1: memref<1x128x128xbf16, #tpu.memory_space<vmem>>, %arg2: memref<1x128x128xbf16, #tpu.memory_space<vmem>>, %arg3: memref<1x128x128xf32, #tpu.memory_space<vmem>>) attributes {dimension_semantics = [#tpu.dimension_semantics<parallel>], iteration_bounds = array<i64: 2>, scalar_prefetch = 0 : i64, scratch_operands = 0 : i64, tpu.core_type = #tpu.core_type<tc>, window_params = [{transform_indices = @transform_0, window_bounds = array<i64: 1, 128, 128>}, {transform_indices = @transform_1, window_bounds = array<i64: 1, 128, 128>}, {transform_indices = @transform_2, window_bounds = array<i64: 1, 128, 128>}]} {
    %c0 = arith.constant 0 : index
    %c0_0 = arith.constant 0 : index
    %c0_1 = arith.constant 0 : index
    %0 = vector.load %arg1[%c0, %c0_0, %c0_1] : memref<1x128x128xbf16, #tpu.memory_space<vmem>>, vector<1x128x128xbf16>
    %1 = vector.shape_cast %0 : vector<1x128x128xbf16> to vector<128x128xbf16>
    %c0_2 = arith.constant 0 : index
    %c0_3 = arith.constant 0 : index
    %c0_4 = arith.constant 0 : index
    %2 = vector.load %arg2[%c0_2, %c0_3, %c0_4] : memref<1x128x128xbf16, #tpu.memory_space<vmem>>, vector<1x128x128xbf16>
    %3 = vector.shape_cast %2 : vector<1x128x128xbf16> to vector<128x128xbf16>
    %cst = arith.constant dense<0.000000e+00> : vector<128x128xf32>
    %4 = tpu.matmul %1, %3, %cst {dimension_numbers = #tpu.dot_dimension_numbers<[1], [1], [0], [0], [0, 0, 1, 0], [], []>} : vector<128x128xbf16>, vector<128x128xbf16>, vector<128x128xf32> -> vector<128x128xf32>
    %c0_5 = arith.constant 0 : index
    %c0_6 = arith.constant 0 : index
    %c0_7 = arith.constant 0 : index
    %5 = vector.load %arg3[%c0_5, %c0_6, %c0_7] : memref<1x128x128xf32, #tpu.memory_space<vmem>>, vector<1x128x128xf32>
    %6 = vector.shape_cast %5 : vector<1x128x128xf32> to vector<128x128xf32>
    %7 = vector.shape_cast %4 : vector<128x128xf32> to vector<1x128x128xf32>
    tpu.vector_store %arg3[%c0_5, %c0_6, %c0_7], %7 {strides = array<i32>} : memref<1x128x128xf32, #tpu.memory_space<vmem>>, vector<1x128x128xf32>,
    return
  }
  func.func @transform_0(%arg0: i32) -> (i32, i32, i32) {
    %c0_i32 = arith.constant 0 : i32
    %c0_i32_0 = arith.constant 0 : i32
    %c0_i32_1 = arith.constant 0 : i32
    return %arg0, %c0_i32, %c0_i32_0 : i32, i32, i32
  }
  func.func @transform_1(%arg0: i32) -> (i32, i32, i32) {
    %c0_i32 = arith.constant 0 : i32
    %c0_i32_0 = arith.constant 0 : i32
    %c0_i32_1 = arith.constant 0 : i32
    return %arg0, %c0_i32, %c0_i32_0 : i32, i32, i32
  }
  func.func @transform_2(%arg0: i32) -> (i32, i32, i32) {
    %c0_i32 = arith.constant 0 : i32
    %c0_i32_0 = arith.constant 0 : i32
    %c0_i32_1 = arith.constant 0 : i32
    return %arg0, %c0_i32, %c0_i32_0 : i32, i32, i32
  }
}

module attributes {stable_mosaic.version = 11 : i64} {
  func.func @_linear_kernel(%arg0: i32, %arg1: memref<16x128xbf16, #tpu.memory_space<vmem>>, %arg2: memref<128x128xbf16, #tpu.memory_space<vmem>>, %arg3: memref<1x128xf32, #tpu.memory_space<vmem>>, %arg4: memref<16x128xbf16, #tpu.memory_space<vmem>>) attributes {dimension_semantics = [#tpu.dimension_semantics<parallel>], iteration_bounds = array<i64: 1>, scalar_prefetch = 0 : i64, scratch_operands = 0 : i64, tpu.core_type = #tpu.core_type<tc>, window_params = [{transform_indices = @transform_0, window_bounds = array<i64: 16, 128>}, {pipeline_mode = #tpu.pipeline_mode<synchronous>, transform_indices = @transform_1, window_bounds = array<i64: 128, 128>}, {pipeline_mode = #tpu.pipeline_mode<synchronous>, transform_indices = @transform_2, window_bounds = array<i64: 1, 128>}, {transform_indices = @transform_3, window_bounds = array<i64: 16, 128>}]} {
    %c0 = arith.constant 0 : index
    %c0_0 = arith.constant 0 : index
    %0 = vector.load %arg1[%c0, %c0_0] : memref<16x128xbf16, #tpu.memory_space<vmem>>, vector<16x128xbf16>
    %c0_1 = arith.constant 0 : index
    %c0_2 = arith.constant 0 : index
    %1 = vector.load %arg2[%c0_1, %c0_2] : memref<128x128xbf16, #tpu.memory_space<vmem>>, vector<128x128xbf16>
    %cst = arith.constant dense<0.000000e+00> : vector<16x128xf32>
    %2 = tpu.matmul %0, %1, %cst {dimension_numbers = #tpu.dot_dimension_numbers<[1], [0], [0], [1], [0, 0, 1, 1], [], []>} : vector<16x128xbf16>, vector<128x128xbf16>, vector<16x128xf32> -> vector<16x128xf32>
    %c0_3 = arith.constant 0 : index
    %c0_4 = arith.constant 0 : index
    %3 = vector.load %arg3[%c0_3, %c0_4] : memref<1x128xf32, #tpu.memory_space<vmem>>, vector<1x128xf32>
    %4 = vector.broadcast %3 : vector<1x128xf32> to vector<16x128xf32>
    %5 = arith.addf %2, %4 : vector<16x128xf32>
    %6 = arith.truncf %5 : vector<16x128xf32> to vector<16x128xbf16>
    %c0_5 = arith.constant 0 : index
    %c0_6 = arith.constant 0 : index
    %7 = vector.load %arg4[%c0_5, %c0_6] : memref<16x128xbf16, #tpu.memory_space<vmem>>, vector<16x128xbf16>
    tpu.vector_store %arg4[%c0_5, %c0_6], %6 {strides = array<i32>} : memref<16x128xbf16, #tpu.memory_space<vmem>>, vector<16x128xbf16>,
    return
  }
  func.func @transform_0(%arg0: i32) -> (i32, i32) {
    %c0_i32 = arith.constant 0 : i32
    %c0_i32_0 = arith.constant 0 : i32
    return %arg0, %c0_i32 : i32, i32
  }
  func.func @transform_1(%arg0: i32) -> (i32, i32) {
    %c0_i32 = arith.constant 0 : i32
    %c0_i32_0 = arith.constant 0 : i32
    %c0_i32_1 = arith.constant 0 : i32
    return %c0_i32, %c0_i32_0 : i32, i32
  }
  func.func @transform_2(%arg0: i32) -> (i32, i32) {
    %c0_i32 = arith.constant 0 : i32
    %c0_i32_0 = arith.constant 0 : i32
    %c0_i32_1 = arith.constant 0 : i32
    return %c0_i32, %c0_i32_0 : i32, i32
  }
  func.func @transform_3(%arg0: i32) -> (i32, i32) {
    %c0_i32 = arith.constant 0 : i32
    %c0_i32_0 = arith.constant 0 : i32
    return %arg0, %c0_i32 : i32, i32
  }
}

</mosaic_0001>

<llo_original>
// kernel: model_forward.7
$region0: #{model_forward.7}
  #allocation0 [shape = 'u32[]', space=smem, size = 0x4, offset = 0x4, fixed_abs, tag = 'smem constant byte address 0x4 - core index']
  #allocation1 [shape = 'u32[144,128]{1,0:T(1,128)}', space=vmem, size = 0x12000, scoped, tag = 'internal scratch']
  %s0 = inlined_call_operand.vmem [shape: bf16[16,128], index: 0, kind: input, shape index: {}]
  %s1 = inlined_call_operand.vmem [shape: bf16[128,256], index: 1, kind: input, shape index: {}]
  %s2 = inlined_call_operand.vmem [shape: f32[1,256], index: 2, kind: input, shape index: {}]
  %s3 = inlined_call_operand.vmem [shape: f32[16,256], index: 3, kind: output, shape index: {}]
  %s4 = sld [smem:[#allocation0]]
  $region22: #{model_forward.7} parent=0
    _
  %s6 = ssub.s32 1, %s4
  %s7 = scalar_select 0, %s6, %s4
  // Predicated region
  $region2: #{model_forward.7} parent=0 // pred_check
    _
  $region3: #{model_forward.7} parent=0 // pred_check_branch
    %9 = sbr.rel (0) target = $region5
  $region4: #{model_forward.7} parent=0 // pred_region
    _
  $region5: #{model_forward.7} parent=0 // pred_fallthru
    _
  // Predicated region
  $region6: #{model_forward.7} parent=0 // pred_check
    _
  $region7: #{model_forward.7} parent=0 // pred_check_branch
    %11 = sbr.rel (0) target = $region9
  $region8: #{model_forward.7} parent=0 // pred_region
    _
  $region9: #{model_forward.7} parent=0 // pred_fallthru
    _
  // Predicated region
  $region10: #{model_forward.7} parent=0 // pred_check
    _
  $region11: #{model_forward.7} parent=0 // pred_check_branch
    %13 = sbr.rel (0) target = $region13
  $region12: #{model_forward.7} parent=0 // pred_region
    _
  $region13: #{model_forward.7} parent=0 // pred_fallthru
    _
  %v15 = vld [vmem:[%s0] sm:$0xf]
  %v16 = vld [vmem:[%s0 + $0x4] sm:$0xf]
  %v17 = vld [vmem:[%s1] sm:$0xff]
  %v18 = vld [vmem:[%s1 + $0x8] sm:$0xff]
  %v19 = vld [vmem:[%s1 + $0x10] sm:$0xff]
  %v20 = vld [vmem:[%s1 + $0x18] sm:$0xff]
  %v21 = vld [vmem:[%s1 + $0x20] sm:$0xff]
  %v22 = vld [vmem:[%s1 + $0x28] sm:$0xff]
  %v23 = vld [vmem:[%s1 + $0x30] sm:$0xff]
  %v24 = vld [vmem:[%s1 + $0x38] sm:$0xff]
  %v25 = vld [vmem:[%s1 + $0x40] sm:$0xff]
  %v26 = vld [vmem:[%s1 + $0x48] sm:$0xff]
  %v27 = vld [vmem:[%s1 + $0x50] sm:$0xff]
  %v28 = vld [vmem:[%s1 + $0x58] sm:$0xff]
  %v29 = vld [vmem:[%s1 + $0x60] sm:$0xff]
  %v30 = vld [vmem:[%s1 + $0x68] sm:$0xff]
  %v31 = vld [vmem:[%s1 + $0x70] sm:$0xff]
  %v32 = vld [vmem:[%s1 + $0x78] sm:$0xff]
  %v33 = vld [vmem:[%s2] sm:$0x3]
  %v35 = vlaneseq
  %v36 = vshrl.u32 %v35, 7
  %v37 = vsub.s32 0, %v36
  %v38 = vrot.slane %v33, %v37
  %v39 = vlaneseq
  %v40 = vshrl.u32 %v39, 7
  %v41 = vsub.s32 1, %v40
  %v42 = vrot.slane %v33, %v41
  %v47 = vunpack.c.l.b16 %v15
  %v48 = vunpack.c.l.b16 %v16
  %v49 = vpack.c.b16 %v48, %v47
  %v67 = vunpack.c.l.b16 %v17
  %v68 = vunpack.c.h.b16 %v17
  %v69 = vunpack.c.l.b16 %v18
  %v70 = vunpack.c.h.b16 %v18
  %v71 = vunpack.c.l.b16 %v19
  %v72 = vunpack.c.h.b16 %v19
  %v73 = vunpack.c.l.b16 %v20
  %v74 = vunpack.c.h.b16 %v20
  %v75 = vunpack.c.l.b16 %v21
  %v76 = vunpack.c.h.b16 %v21
  %v77 = vunpack.c.l.b16 %v22
  %v78 = vunpack.c.h.b16 %v22
  %v79 = vunpack.c.l.b16 %v23
  %v80 = vunpack.c.h.b16 %v23
  %v81 = vunpack.c.l.b16 %v24
  %v82 = vunpack.c.h.b16 %v24
  %v83 = vunpack.c.l.b16 %v25
  %v84 = vunpack.c.h.b16 %v25
  %v85 = vunpack.c.l.b16 %v26
  %v86 = vunpack.c.h.b16 %v26
  %v87 = vunpack.c.l.b16 %v27
  %v88 = vunpack.c.h.b16 %v27
  %v89 = vunpack.c.l.b16 %v28
  %v90 = vunpack.c.h.b16 %v28
  %v91 = vunpack.c.l.b16 %v29
  %v92 = vunpack.c.h.b16 %v29
  %v93 = vunpack.c.l.b16 %v30
  %v94 = vunpack.c.h.b16 %v30
  %v95 = vunpack.c.l.b16 %v31
  %v96 = vunpack.c.h.b16 %v31
  %v97 = vunpack.c.l.b16 %v32
  %v98 = vunpack.c.h.b16 %v32
  %v99 = vpack.c.b16 %v69, %v67
  %v100 = vpack.c.b16 %v70, %v68
  %v101 = vpack.c.b16 %v73, %v71
  %v102 = vpack.c.b16 %v74, %v72
  %v103 = vpack.c.b16 %v77, %v75
  %v104 = vpack.c.b16 %v78, %v76
  %v105 = vpack.c.b16 %v81, %v79
  %v106 = vpack.c.b16 %v82, %v80
  %v107 = vpack.c.b16 %v85, %v83
  %v108 = vpack.c.b16 %v86, %v84
  %v109 = vpack.c.b16 %v89, %v87
  %v110 = vpack.c.b16 %v90, %v88
  %v111 = vpack.c.b16 %v93, %v91
  %v112 = vpack.c.b16 %v94, %v92
  %v113 = vpack.c.b16 %v97, %v95
  %v114 = vpack.c.b16 %v98, %v96
  %131 = vmatprep.subr.bf16.mxu0 %v100
  %132 = vmatpush1.bf16.msra.mxu0 %v99
  %133 = vmatprep.subr.bf16.mxu0 %v102
  %134 = vmatpush1.bf16.msra.mxu0 %v101
  %135 = vmatprep.subr.bf16.mxu0 %v104
  %136 = vmatpush1.bf16.msra.mxu0 %v103
  %137 = vmatprep.subr.bf16.mxu0 %v106
  %138 = vmatpush1.bf16.msra.mxu0 %v105
  %139 = vmatprep.subr.bf16.mxu0 %v108
  %140 = vmatpush1.bf16.msra.mxu0 %v107
  %141 = vmatprep.subr.bf16.mxu0 %v110
  %142 = vmatpush1.bf16.msra.mxu0 %v109
  %143 = vmatprep.subr.bf16.mxu0 %v112
  %144 = vmatpush1.bf16.msra.mxu0 %v111
  %145 = vmatprep.subr.bf16.mxu0 %v114
  %146 = vmatpush1.bf16.msra.mxu0 %v113
  %147 = vmatprep.subr.bf16.mxu0 0
  %148 = vmatpush1.bf16.msra.mxu0 0
  %149 = vmatprep.subr.bf16.mxu0 0
  %150 = vmatpush1.bf16.msra.mxu0 0
  %151 = vmatprep.subr.bf16.mxu0 0
  %152 = vmatpush1.bf16.msra.mxu0 0
  %153 = vmatprep.subr.bf16.mxu0 0
  %154 = vmatpush1.bf16.msra.mxu0 0
  %155 = vmatprep.subr.bf16.mxu0 0
  %156 = vmatpush1.bf16.msra.mxu0 0
  %157 = vmatprep.subr.bf16.mxu0 0
  %158 = vmatpush1.bf16.msra.mxu0 0
  %159 = vmatprep.subr.bf16.mxu0 0
  %160 = vmatpush1.bf16.msra.mxu0 0
  %161 = vmatprep.subr.bf16.mxu0 0
  %162 = vmatpush1.bf16.msra.mxu0 0
  %163 = vmatprep.mubr.bf16.mxu0 0
  %164 = vmatmul.mubr.bf16.gmra.mrb[0].mxu0 %v49
  %v165 = vpop.f32.mrb[0].mxu0
  %v166 = vadd.f32 %v38, %v165
  %v167 = vpop.f32.mrb[0].mxu0
  %v168 = vadd.f32 %v42, %v167
  %v169 = vpop.f32.mrb[0].mxu0
  %v170 = vadd.f32 %v38, %v169
  %v171 = vpop.f32.mrb[0].mxu0
  %v172 = vadd.f32 %v42, %v171
  %173 = vdwg.mxu0
  %174 = vst [vmem:[%s3] sm:$0xff] %v166
  %175 = vst [vmem:[%s3 + $0x8] sm:$0xff] %v168
  %176 = vst [vmem:[%s3 + $0x10] sm:$0xff] %v170
  %177 = vst [vmem:[%s3 + $0x18] sm:$0xff] %v172
  // Predicated region
  $region14: #{model_forward.7} parent=0 // pred_check
    _
  $region15: #{model_forward.7} parent=0 // pred_check_branch
    %179 = sbr.rel (0) target = $region17
  $region16: #{model_forward.7} parent=0 // pred_region
    _
  $region17: #{model_forward.7} parent=0 // pred_fallthru
    _
  // Predicated region
  $region18: #{model_forward.7} parent=0 // pred_check
    _
  $region19: #{model_forward.7} parent=0 // pred_check_branch
    %181 = sbr.rel (0) target = $region21
  $region20: #{model_forward.7} parent=0 // pred_region
    _
  $region21: #{model_forward.7} parent=0 // pred_fallthru
    _

// kernel: model_forward.8
$region0: #{model_forward.8}
  #allocation0 [shape = 'u32[]', space=smem, size = 0x4, offset = 0x4, fixed_abs, tag = 'smem constant byte address 0x4 - core index']
  #allocation1 [shape = 'u32[144,128]{1,0:T(1,128)}', space=vmem, size = 0x12000, scoped, tag = 'internal scratch']
  #allocation2 [shape = 'f32[2,32]{1,0:T(2,128)}', space=vmem, size = 0x400, scoped, tag = 'scratch operand']
  #allocation3 [shape = 'f32[2,32]{1,0:T(2,128)}', space=vmem, size = 0x400, scoped, tag = 'scratch operand']
  #allocation4 [shape = 'f32[2,32]{1,0:T(2,128)}', space=vmem, size = 0x400, scoped, tag = 'scratch operand']
  #allocation5 [shape = 'f32[2,32]{1,0:T(2,128)}', space=vmem, size = 0x400, scoped, tag = 'scratch operand']
  %s0 = inlined_call_operand.vmem [shape: f32[8,2,128], index: 0, kind: input, shape index: {}]
  %s1 = inlined_call_operand.vmem [shape: f32[8,2,128], index: 1, kind: input, shape index: {}]
  %s2 = inlined_call_operand.vmem [shape: bf16[32,128], index: 2, kind: input, shape index: {}]
  %s3 = inlined_call_operand.vmem [shape: bf16[32,128], index: 3, kind: input, shape index: {}]
  %s4 = inlined_call_operand.vmem [shape: f32[8,2,32], index: 4, kind: output, shape index: {0}]
  %s5 = inlined_call_operand.vmem [shape: f32[8,2,32], index: 5, kind: output, shape index: {1}]
  %6 = xla_tuple %s4, %s5
  %s7 = sld [smem:[#allocation0]]
  $region61: #{model_forward.8} parent=0
    _
  %s9 = ssub.s32 1, %s7
  %s10 = scalar_select 0, %s9, %s7
  loop: start=0, step=1, limit=10
  $region2: #{model_forward.8} parent=0 // loop_pre_header
    _
  $region3: #{model_forward.8} parent=0 // loop_header
    %s12 = sphi 0, %s16
    %p13 = scmp.ge.s32.totalorder %s12, 10
    %s22 = sphi 0, %s24
    %s25 = sphi 0, %s22
    %s26 = sphi 0, %s25
    %s42 = sphi 0, %s26
    %s48 = sphi 0, %s50
    %s51 = sphi 0, %s48
    %s52 = sphi 0, %s51
    %s68 = sphi 0, %s52
    %s72 = sphi 0, %s72
    %s74 = sphi 0, %s72
    %s75 = sphi 0, %s74
    %s89 = sphi 0, %s75
    %s93 = sphi 0, %s93
    %s95 = sphi 0, %s93
    %s96 = sphi 0, %s95
    %s110 = sphi 0, %s96
    %s116 = sphi 0, %s118
    %s119 = sphi 0, %s116
    %s120 = sphi 0, %s119
    %s136 = sphi 0, %s120
    %s142 = sphi 0, %s144
    %s145 = sphi 0, %s142
    %s146 = sphi 0, %s145
    %s162 = sphi 0, %s146
  $region4: #{model_forward.8} parent=0 // loop_header_branch
    %15 = sbr.rel (%p13) target = $region8
  $region5: #{model_forward.8} parent=0 // loop_body
    %s17 = ssub.s32 %s12, 1
    %s18 = ssub.s32 %s12, 2
    %s19 = sadd.s32 %s12, 1
    %s20 = ssub.s32 %s12, %s19
    %p21 = scmp.eq.s32.totalorder %s20, 0
    %s23 = sadd.s32 %s22, 1
    %s24 = scalar_select %p21, %s22, %s23
    %p27 = pneg %p21
    %p28 = scmp.eq.s32.totalorder %s12, 7
    %p29 = por %p27, %p28
    %p30 = scmp.ne.s32.totalorder %s22, %s25
    %p31 = scmp.eq.s32.totalorder %s12, 0
    %p32 = por %p30, %p31
    %p33 = scmp.ne.s32.totalorder %s22, %s25
    %p34 = scmp.eq.s32.totalorder %s17, 7
    %p35 = por %p33, %p34
    %p36 = scmp.ne.s32.totalorder %s25, %s26
    %p37 = scmp.eq.s32.totalorder %s17, 0
    %p38 = por %p36, %p37
    %p39 = scmp.ne.s32.totalorder %s25, %s26
    %p40 = scmp.eq.s32.totalorder %s18, 7
    %p41 = por %p39, %p40
    %p43 = scmp.ne.s32.totalorder %s26, %s42
    %p44 = scmp.eq.s32.totalorder %s18, 0
    %p45 = por %p43, %p44
    %s46 = ssub.s32 %s12, %s19
    %p47 = scmp.eq.s32.totalorder %s46, 0
    %s49 = sadd.s32 %s48, 1
    %s50 = scalar_select %p47, %s48, %s49
    %p53 = pneg %p47
    %p54 = scmp.eq.s32.totalorder %s12, 7
    %p55 = por %p53, %p54
    %p56 = scmp.ne.s32.totalorder %s48, %s51
    %p57 = scmp.eq.s32.totalorder %s12, 0
    %p58 = por %p56, %p57
    %p59 = scmp.ne.s32.totalorder %s48, %s51
    %p60 = scmp.eq.s32.totalorder %s17, 7
    %p61 = por %p59, %p60
    %p62 = scmp.ne.s32.totalorder %s51, %s52
    %p63 = scmp.eq.s32.totalorder %s17, 0
    %p64 = por %p62, %p63
    %p65 = scmp.ne.s32.totalorder %s51, %s52
    %p66 = scmp.eq.s32.totalorder %s18, 7
    %p67 = por %p65, %p66
    %p69 = scmp.ne.s32.totalorder %s52, %s68
    %p70 = scmp.eq.s32.totalorder %s18, 0
    %p71 = por %p69, %p70
    %s73 = sadd.s32 %s72, 1
    %p76 = scmp.eq.s32.totalorder %s12, 7
    %p77 = scmp.ne.s32.totalorder %s72, %s74
    %p78 = scmp.eq.s32.totalorder %s12, 0
    %p79 = por %p77, %p78
    %p80 = scmp.ne.s32.totalorder %s72, %s74
    %p81 = scmp.eq.s32.totalorder %s17, 7
    %p82 = por %p80, %p81
    %p83 = scmp.ne.s32.totalorder %s74, %s75
    %p84 = scmp.eq.s32.totalorder %s17, 0
    %p85 = por %p83, %p84
    %p86 = scmp.ne.s32.totalorder %s74, %s75
    %p87 = scmp.eq.s32.totalorder %s18, 7
    %p88 = por %p86, %p87
    %p90 = scmp.ne.s32.totalorder %s75, %s89
    %p91 = scmp.eq.s32.totalorder %s18, 0
    %p92 = por %p90, %p91
    %s94 = sadd.s32 %s93, 1
    %p97 = scmp.eq.s32.totalorder %s12, 7
    %p98 = scmp.ne.s32.totalorder %s93, %s95
    %p99 = scmp.eq.s32.totalorder %s12, 0
    %p100 = por %p98, %p99
    %p101 = scmp.ne.s32.totalorder %s93, %s95
    %p102 = scmp.eq.s32.totalorder %s17, 7
    %p103 = por %p101, %p102
    %p104 = scmp.ne.s32.totalorder %s95, %s96
    %p105 = scmp.eq.s32.totalorder %s17, 0
    %p106 = por %p104, %p105
    %p107 = scmp.ne.s32.totalorder %s95, %s96
    %p108 = scmp.eq.s32.totalorder %s18, 7
    %p109 = por %p107, %p108
    %p111 = scmp.ne.s32.totalorder %s96, %s110
    %p112 = scmp.eq.s32.totalorder %s18, 0
    %p113 = por %p111, %p112
    %s114 = ssub.s32 %s12, %s19
    %p115 = scmp.eq.s32.totalorder %s114, 0
    %s117 = sadd.s32 %s116, 1
    %s118 = scalar_select %p115, %s116, %s117
    %p121 = pneg %p115
    %p122 = scmp.eq.s32.totalorder %s12, 7
    %p123 = por %p121, %p122
    %p124 = scmp.ne.s32.totalorder %s116, %s119
    %p125 = scmp.eq.s32.totalorder %s12, 0
    %p126 = por %p124, %p125
    %p127 = scmp.ne.s32.totalorder %s116, %s119
    %p128 = scmp.eq.s32.totalorder %s17, 7
    %p129 = por %p127, %p128
    %p130 = scmp.ne.s32.totalorder %s119, %s120
    %p131 = scmp.eq.s32.totalorder %s17, 0
    %p132 = por %p130, %p131
    %p133 = scmp.ne.s32.totalorder %s119, %s120
    %p134 = scmp.eq.s32.totalorder %s18, 7
    %p135 = por %p133, %p134
    %p137 = scmp.ne.s32.totalorder %s120, %s136
    %p138 = scmp.eq.s32.totalorder %s18, 0
    %p139 = por %p137, %p138
    %s140 = ssub.s32 %s12, %s19
    %p141 = scmp.eq.s32.totalorder %s140, 0
    %s143 = sadd.s32 %s142, 1
    %s144 = scalar_select %p141, %s142, %s143
    %p147 = pneg %p141
    %p148 = scmp.eq.s32.totalorder %s12, 7
    %p149 = por %p147, %p148
    %p150 = scmp.ne.s32.totalorder %s142, %s145
    %p151 = scmp.eq.s32.totalorder %s12, 0
    %p152 = por %p150, %p151
    %p153 = scmp.ne.s32.totalorder %s142, %s145
    %p154 = scmp.eq.s32.totalorder %s17, 7
    %p155 = por %p153, %p154
    %p156 = scmp.ne.s32.totalorder %s145, %s146
    %p157 = scmp.eq.s32.totalorder %s17, 0
    %p158 = por %p156, %p157
    %p159 = scmp.ne.s32.totalorder %s145, %s146
    %p160 = scmp.eq.s32.totalorder %s18, 7
    %p161 = por %p159, %p160
    %p163 = scmp.ne.s32.totalorder %s146, %s162
    %p164 = scmp.eq.s32.totalorder %s18, 0
    %p165 = por %p163, %p164
    %p166 = scmp.le.s32.totalorder 1, %s12
    %p167 = scmp.lt.s32.totalorder %s12, 9
    %p168 = pnand %p166, %p167
    %p169 = pneg %p168
    // Predicated region
    $region9: #{model_forward.8} parent=5 // pred_check
      _
    $region10: #{model_forward.8} parent=5 // pred_check_branch
      %171 = sbr.rel (%p168) target = $region12
    $region11: #{model_forward.8} parent=5 // pred_region
      %s172 = ssub.s32 %s12, 1
      // Predicated region
      $region13: #{model_forward.8} parent=11 // pred_check
        %p173 = pneg %p85
      $region14: #{model_forward.8} parent=11 // pred_check_branch
        %175 = sbr.rel (%p173) target = $region16
      $region15: #{model_forward.8} parent=11 // pred_region
        _
      $region16: #{model_forward.8} parent=11 // pred_fallthru
        _
      // Predicated region
      $region17: #{model_forward.8} parent=11 // pred_check
        %p176 = pneg %p106
      $region18: #{model_forward.8} parent=11 // pred_check_branch
        %178 = sbr.rel (%p176) target = $region20
      $region19: #{model_forward.8} parent=11 // pred_region
        _
      $region20: #{model_forward.8} parent=11 // pred_fallthru
        _
    $region12: #{model_forward.8} parent=5 // pred_fallthru
      _
    %p179 = scmp.lt.s32.totalorder %s12, 8
    // Predicated region
    $region21: #{model_forward.8} parent=5 // pred_check
      %p180 = pneg %p179
    $region22: #{model_forward.8} parent=5 // pred_check_branch
      %182 = sbr.rel (%p180) target = $region24
    $region23: #{model_forward.8} parent=5 // pred_region
      // Predicated region
      $region25: #{model_forward.8} parent=23 // pred_check
        %p183 = pneg %p32
      $region26: #{model_forward.8} parent=23 // pred_check_branch
        %185 = sbr.rel (%p183) target = $region28
      $region27: #{model_forward.8} parent=23 // pred_region
        %p186 = scmp.lt.s32.totalorder %s12, 7
        %s187 = scalar_select %p186, %s12, 7
        %s188 = smul.addr %s187, 2
        %s189 = scalar_lea.vmem %s0, %s188
      $region28: #{model_forward.8} parent=23 // pred_fallthru
        _
      // Predicated region
      $region29: #{model_forward.8} parent=23 // pred_check
        %p190 = pneg %p58
      $region30: #{model_forward.8} parent=23 // pred_check_branch
        %192 = sbr.rel (%p190) target = $region32
      $region31: #{model_forward.8} parent=23 // pred_region
        %p193 = scmp.lt.s32.totalorder %s12, 7
        %s194 = scalar_select %p193, %s12, 7
        %s195 = smul.addr %s194, 2
        %s196 = scalar_lea.vmem %s1, %s195
      $region32: #{model_forward.8} parent=23 // pred_fallthru
        _
    $region24: #{model_forward.8} parent=5 // pred_fallthru
      _
    %p197 = scmp.le.s32.totalorder 1, %s12
    %p198 = scmp.lt.s32.totalorder %s12, 9
    %p199 = pnand %p197, %p198
    %p200 = pneg %p199
    // Predicated region
    $region33: #{model_forward.8} parent=5 // pred_check
      _
    $region34: #{model_forward.8} parent=5 // pred_check_branch
      %202 = sbr.rel (%p199) target = $region36
    $region35: #{model_forward.8} parent=5 // pred_region
      %s203 = ssub.s32 %s12, 1
      %p204 = scmp.lt.s32.totalorder %s17, 7
      %s205 = scalar_select %p204, %s17, 7
      %s206 = smul.addr %s205, 2
      %s207 = scalar_lea.vmem %s0, %s206
      %p208 = pneg %p38
      %p209 = pneg %p35
      %p210 = scmp.lt.s32.totalorder %s17, 7
      %s211 = scalar_select %p210, %s17, 7
      %s212 = smul.addr %s211, 2
      %s213 = scalar_lea.vmem %s1, %s212
      %p214 = pneg %p64
      %p215 = pneg %p61
      %p216 = pneg %p85
      %p217 = pneg %p82
      %p218 = pneg %p106
      %p219 = pneg %p103
      %p220 = pneg %p132
      %p221 = pneg %p129
      %p222 = scmp.lt.s32.totalorder %s17, 7
      %s223 = scalar_select %p222, %s17, 7
      %s224 = smul.addr %s223, 2
      %s225 = scalar_lea.vmem %s4, %s224
      %p226 = pneg %p158
      %p227 = pneg %p155
      %p228 = scmp.lt.s32.totalorder %s17, 7
      %s229 = scalar_select %p228, %s17, 7
      %s230 = smul.addr %s229, 2
      %s231 = scalar_lea.vmem %s5, %s230
      %p232 = scmp.lt.s32.totalorder %s17, 7
      %s233 = scalar_select %p232, %s17, 7
      %s234 = smul.addr %s233, 2
      %s235 = scalar_lea.vmem %s0, %s234
      %p236 = scmp.lt.s32.totalorder %s17, 7
      %s237 = scalar_select %p236, %s17, 7
      %s238 = smul.addr %s237, 2
      %s239 = scalar_lea.vmem %s1, %s238
      %p240 = scmp.lt.s32.totalorder %s17, 7
      %s241 = scalar_select %p240, %s17, 7
      %s242 = smul.addr %s241, 2
      %s243 = scalar_lea.vmem %s4, %s242
      %p244 = scmp.lt.s32.totalorder %s17, 7
      %s245 = scalar_select %p244, %s17, 7
      %s246 = smul.addr %s245, 2
      %s247 = scalar_lea.vmem %s5, %s246
      %p249 = scmp.eq.s32.totalorder %s17, 0
      // Predicated region
      $region37: #{model_forward.8} parent=35 // pred_check
        %p250 = pneg %p249
      $region38: #{model_forward.8} parent=35 // pred_check_branch
        %252 = sbr.rel (%p250) target = $region40
      $region39: #{model_forward.8} parent=35 // pred_region
        %vm253 = vcmask 254976
        %254 = vst.msk [vmem:[#allocation2] sm:$0x3] %vm253, 0.0
        %255 = vst.msk [vmem:[#allocation3] sm:$0x3] %vm253, 0.0
        %256 = vst.msk [vmem:[#allocation4] sm:$0x3] %vm253, 0.0
        %257 = vst.msk [vmem:[#allocation5] sm:$0x3] %vm253, 0.0
      $region40: #{model_forward.8} parent=35 // pred_fallthru
        _
      %v258 = vld [vmem:[%s235] sm:$0x3]
      %v259 = vld [vmem:[#allocation2] sm:$0x3]
      %v260 = vpack.c.bf16 %v259, %v259
      %v261 = vld [vmem:[%s2] sm:$0xf]
      %v262 = vld [vmem:[%s2 + $0x4] sm:$0xf]
      %v263 = vld [vmem:[%s2 + $0x8] sm:$0xf]
      %v264 = vld [vmem:[%s2 + $0xc] sm:$0xf]
      %v269 = vunpack.c.l.b16 %v261
      %v270 = vunpack.c.l.b16 %v262
      %v271 = vunpack.c.l.b16 %v263
      %v272 = vunpack.c.l.b16 %v264
      %v273 = vpack.c.b16 %v270, %v269
      %v274 = vpack.c.b16 %v272, %v271
      %vm277 = vcmask 261120
      %v279 = vsel %vm277, %v260, 0
      %281 = vmatprep.subr.bf16.mxu0 0
      %282 = vmatpush1.bf16.msra.mxu0 %v273
      %283 = vmatprep.subr.bf16.mxu0 0
      %284 = vmatpush1.bf16.msra.mxu0 %v274
      %285 = vmatprep.subr.bf16.mxu0 0
      %286 = vmatpush1.bf16.msra.mxu0 0
      %287 = vmatprep.subr.bf16.mxu0 0
      %288 = vmatpush1.bf16.msra.mxu0 0
      %289 = vmatprep.subr.bf16.mxu0 0
      %290 = vmatpush1.bf16.msra.mxu0 0
      %291 = vmatprep.subr.bf16.mxu0 0
      %292 = vmatpush1.bf16.msra.mxu0 0
      %293 = vmatprep.subr.bf16.mxu0 0
      %294 = vmatpush1.bf16.msra.mxu0 0
      %295 = vmatprep.subr.bf16.mxu0 0
      %296 = vmatpush1.bf16.msra.mxu0 0
      %297 = vmatprep.subr.bf16.mxu0 0
      %298 = vmatpush1.bf16.msra.mxu0 0
      %299 = vmatprep.subr.bf16.mxu0 0
      %300 = vmatpush1.bf16.msra.mxu0 0
      %301 = vmatprep.subr.bf16.mxu0 0
      %302 = vmatpush1.bf16.msra.mxu0 0
      %303 = vmatprep.subr.bf16.mxu0 0
      %304 = vmatpush1.bf16.msra.mxu0 0
      %305 = vmatprep.subr.bf16.mxu0 0
      %306 = vmatpush1.bf16.msra.mxu0 0
      %307 = vmatprep.subr.bf16.mxu0 0
      %308 = vmatpush1.bf16.msra.mxu0 0
      %309 = vmatprep.subr.bf16.mxu0 0
      %310 = vmatpush1.bf16.msra.mxu0 0
      %311 = vmatprep.subr.bf16.mxu0 0
      %312 = vmatpush1.bf16.msra.mxu0 0
      %313 = vmatprep.mubr.bf16.mxu0 0
      %314 = vmatmul.mubr.bf16.gmra.mrb[0].mxu0 %v279
      %v315 = vpop.f32.mrb[0].mxu0
      %v316 = vadd.f32 0.0, %v315
      %v317 = vpop.f32.mrb[0].mxu0
      %v318 = vpop.f32.mrb[0].mxu0
      %v319 = vpop.f32.mrb[0].mxu0
      %320 = vdwg.mxu0
      %v321 = vadd.f32 %v258, %v316
      %v322 = vxor.u32 %v321, 2147483648
      %v323 = vmul.f32 %v322, 1.442695
      %v324 = vpow.pop %v323
      %v325 = vadd.f32 %v324, 1.0
      %v326 = vrcp.pop %v325
      %v327 = vmul.f32 1.0, %v326
      %v328 = vtanh.pop %v321
      %v329 = vld [vmem:[#allocation3] sm:$0x3]
      %331 = vrot.lane.b32.xlu0 %v329, 32
      %v332 = vpop.permute.xlu0 %331
      %v334 = vmul.f32 %v327, %v332
      %336 = vrot.lane.b32.xlu0 %v328, 64
      %v337 = vpop.permute.xlu0 %336
      %v339 = vmul.f32 %v327, %v337
      %341 = vrot.lane.b32.xlu0 %v339, 32
      %v342 = vpop.permute.xlu0 %341
      %v344 = vadd.f32 %v334, %v342
      %v345 = vtanh.pop %v344
      %347 = vrot.lane.b32.xlu0 %v345, 64
      %v348 = vpop.permute.xlu0 %347
      %v350 = vmul.f32 %v327, %v348
      %352 = vrot.lane.b32.xlu0 %v344, 96
      %v353 = vpop.permute.xlu0 %352
      %vm355 = vcmask 254976
      %356 = vst.msk [vmem:[#allocation3] sm:$0x3] %vm355, %v353
      %358 = vrot.lane.b32.xlu0 %v350, 32
      %v359 = vpop.permute.xlu0 %358
      %361 = vst.msk [vmem:[#allocation2] sm:$0x3] %vm355, %v359
      %362 = vst.msk [vmem:[%s243] sm:$0x3] %vm355, %v359
      %v363 = vld [vmem:[%s239] sm:$0x3]
      %v364 = vld [vmem:[#allocation4] sm:$0x3]
      %v365 = vpack.c.bf16 %v364, %v364
      %v366 = vld [vmem:[%s3] sm:$0xf]
      %v367 = vld [vmem:[%s3 + $0x4] sm:$0xf]
      %v368 = vld [vmem:[%s3 + $0x8] sm:$0xf]
      %v369 = vld [vmem:[%s3 + $0xc] sm:$0xf]
      %v374 = vunpack.c.l.b16 %v366
      %v375 = vunpack.c.l.b16 %v367
      %v376 = vunpack.c.l.b16 %v368
      %v377 = vunpack.c.l.b16 %v369
      %v378 = vpack.c.b16 %v375, %v374
      %v379 = vpack.c.b16 %v377, %v376
      %v383 = vsel %vm277, %v365, 0
      %385 = vmatprep.subr.bf16.mxu0 0
      %386 = vmatpush1.bf16.msra.mxu0 %v378
      %387 = vmatprep.subr.bf16.mxu0 0
      %388 = vmatpush1.bf16.msra.mxu0 %v379
      %389 = vmatprep.subr.bf16.mxu0 0
      %390 = vmatpush1.bf16.msra.mxu0 0
      %391 = vmatprep.subr.bf16.mxu0 0
      %392 = vmatpush1.bf16.msra.mxu0 0
      %393 = vmatprep.subr.bf16.mxu0 0
      %394 = vmatpush1.bf16.msra.mxu0 0
      %395 = vmatprep.subr.bf16.mxu0 0
      %396 = vmatpush1.bf16.msra.mxu0 0
      %397 = vmatprep.subr.bf16.mxu0 0
      %398 = vmatpush1.bf16.msra.mxu0 0
      %399 = vmatprep.subr.bf16.mxu0 0
      %400 = vmatpush1.bf16.msra.mxu0 0
      %401 = vmatprep.subr.bf16.mxu0 0
      %402 = vmatpush1.bf16.msra.mxu0 0
      %403 = vmatprep.subr.bf16.mxu0 0
      %404 = vmatpush1.bf16.msra.mxu0 0
      %405 = vmatprep.subr.bf16.mxu0 0
      %406 = vmatpush1.bf16.msra.mxu0 0
      %407 = vmatprep.subr.bf16.mxu0 0
      %408 = vmatpush1.bf16.msra.mxu0 0
      %409 = vmatprep.subr.bf16.mxu0 0
      %410 = vmatpush1.bf16.msra.mxu0 0
      %411 = vmatprep.subr.bf16.mxu0 0
      %412 = vmatpush1.bf16.msra.mxu0 0
      %413 = vmatprep.subr.bf16.mxu0 0
      %414 = vmatpush1.bf16.msra.mxu0 0
      %415 = vmatprep.subr.bf16.mxu0 0
      %416 = vmatpush1.bf16.msra.mxu0 0
      %417 = vmatprep.mubr.bf16.mxu0 0
      %418 = vmatmul.mubr.bf16.gmra.mrb[0].mxu0 %v383
      %v419 = vpop.f32.mrb[0].mxu0
      %v420 = vadd.f32 0.0, %v419
      %v421 = vpop.f32.mrb[0].mxu0
      %v422 = vpop.f32.mrb[0].mxu0
      %v423 = vpop.f32.mrb[0].mxu0
      %424 = vdwg.mxu0
      %v425 = vadd.f32 %v363, %v420
      %v426 = vxor.u32 %v425, 2147483648
      %v427 = vmul.f32 %v426, 1.442695
      %v428 = vpow.pop %v427
      %v429 = vadd.f32 %v428, 1.0
      %v430 = vrcp.pop %v429
      %v431 = vmul.f32 1.0, %v430
      %v432 = vtanh.pop %v425
      %v433 = vld [vmem:[#allocation5] sm:$0x3]
      %435 = vrot.lane.b32.xlu0 %v433, 32
      %v436 = vpop.permute.xlu0 %435
      %v438 = vmul.f32 %v431, %v436
      %440 = vrot.lane.b32.xlu0 %v432, 64
      %v441 = vpop.permute.xlu0 %440
      %v443 = vmul.f32 %v431, %v441
      %445 = vrot.lane.b32.xlu0 %v443, 32
      %v446 = vpop.permute.xlu0 %445
      %v448 = vadd.f32 %v438, %v446
      %v449 = vtanh.pop %v448
      %451 = vrot.lane.b32.xlu0 %v449, 64
      %v452 = vpop.permute.xlu0 %451
      %v454 = vmul.f32 %v431, %v452
      %456 = vrot.lane.b32.xlu0 %v448, 96
      %v457 = vpop.permute.xlu0 %456
      %459 = vst.msk [vmem:[#allocation5] sm:$0x3] %vm355, %v457
      %461 = vrot.lane.b32.xlu0 %v454, 32
      %v462 = vpop.permute.xlu0 %461
      %464 = vst.msk [vmem:[#allocation4] sm:$0x3] %vm355, %v462
      %465 = vst.msk [vmem:[%s247] sm:$0x3] %vm355, %v462
      %p466 = scmp.lt.s32.totalorder %s17, 7
      %s467 = scalar_select %p466, %s17, 7
      %s468 = smul.addr %s467, 2
      %s469 = scalar_lea.vmem %s4, %s468
      %p470 = scmp.lt.s32.totalorder %s17, 7
      %s471 = scalar_select %p470, %s17, 7
      %s472 = smul.addr %s471, 2
      %s473 = scalar_lea.vmem %s5, %s472
      // Predicated region
      $region41: #{model_forward.8} parent=35 // pred_check
        %p474 = pneg %p129
      $region42: #{model_forward.8} parent=35 // pred_check_branch
        %476 = sbr.rel (%p474) target = $region44
      $region43: #{model_forward.8} parent=35 // pred_region
        _
      $region44: #{model_forward.8} parent=35 // pred_fallthru
        _
      // Predicated region
      $region45: #{model_forward.8} parent=35 // pred_check
        %p477 = pneg %p155
      $region46: #{model_forward.8} parent=35 // pred_check_branch
        %479 = sbr.rel (%p477) target = $region48
      $region47: #{model_forward.8} parent=35 // pred_region
        _
      $region48: #{model_forward.8} parent=35 // pred_fallthru
        _
    $region36: #{model_forward.8} parent=5 // pred_fallthru
      _
    %p480 = scmp.le.s32.totalorder 2, %s12
    // Predicated region
    $region49: #{model_forward.8} parent=5 // pred_check
      %p481 = pneg %p480
    $region50: #{model_forward.8} parent=5 // pred_check_branch
      %483 = sbr.rel (%p481) target = $region52
    $region51: #{model_forward.8} parent=5 // pred_region
      %s484 = ssub.s32 %s12, 2
      // Predicated region
      $region53: #{model_forward.8} parent=51 // pred_check
        %p485 = pneg %p135
      $region54: #{model_forward.8} parent=51 // pred_check_branch
        %487 = sbr.rel (%p485) target = $region56
      $region55: #{model_forward.8} parent=51 // pred_region
        %p488 = scmp.lt.s32.totalorder %s18, 7
        %s489 = scalar_select %p488, %s18, 7
        %s490 = smul.addr %s489, 2
        %s491 = scalar_lea.vmem %s4, %s490
      $region56: #{model_forward.8} parent=51 // pred_fallthru
        _
      // Predicated region
      $region57: #{model_forward.8} parent=51 // pred_check
        %p492 = pneg %p161
      $region58: #{model_forward.8} parent=51 // pred_check_branch
        %494 = sbr.rel (%p492) target = $region60
      $region59: #{model_forward.8} parent=51 // pred_region
        %p495 = scmp.lt.s32.totalorder %s18, 7
        %s496 = scalar_select %p495, %s18, 7
        %s497 = smul.addr %s496, 2
        %s498 = scalar_lea.vmem %s5, %s497
      $region60: #{model_forward.8} parent=51 // pred_fallthru
        _
    $region52: #{model_forward.8} parent=5 // pred_fallthru
      _
  $region6: #{model_forward.8} parent=0 // loop_footer
    %s16 = sadd.s32 1, %s12
  $region7: #{model_forward.8} parent=0 // loop_footer_branch
    %11 = sbr.rel target = $region3
  $region8: #{model_forward.8} parent=0 // loop_exit
    _

// kernel: model_forward.11
$region0: #{model_forward.11}
  #allocation0 [shape = 'u32[]', space=smem, size = 0x4, offset = 0x4, fixed_abs, tag = 'smem constant byte address 0x4 - core index']
  #allocation1 [shape = 'u32[144,128]{1,0:T(1,128)}', space=vmem, size = 0x12000, scoped, tag = 'internal scratch']
  %s0 = inlined_call_operand.vmem [shape: bf16[16,128], index: 0, kind: input, shape index: {}]
  %s1 = inlined_call_operand.vmem [shape: bf16[128,128], index: 1, kind: input, shape index: {}]
  %s2 = inlined_call_operand.vmem [shape: f32[1,128], index: 2, kind: input, shape index: {}]
  %s3 = inlined_call_operand.vmem [shape: bf16[16,128], index: 3, kind: output, shape index: {}]
  %s4 = sld [smem:[#allocation0]]
  $region22: #{model_forward.11} parent=0
    _
  %s6 = ssub.s32 1, %s4
  %s7 = scalar_select 0, %s6, %s4
  // Predicated region
  $region2: #{model_forward.11} parent=0 // pred_check
    _
  $region3: #{model_forward.11} parent=0 // pred_check_branch
    %9 = sbr.rel (0) target = $region5
  $region4: #{model_forward.11} parent=0 // pred_region
    _
  $region5: #{model_forward.11} parent=0 // pred_fallthru
    _
  // Predicated region
  $region6: #{model_forward.11} parent=0 // pred_check
    _
  $region7: #{model_forward.11} parent=0 // pred_check_branch
    %11 = sbr.rel (0) target = $region9
  $region8: #{model_forward.11} parent=0 // pred_region
    _
  $region9: #{model_forward.11} parent=0 // pred_fallthru
    _
  // Predicated region
  $region10: #{model_forward.11} parent=0 // pred_check
    _
  $region11: #{model_forward.11} parent=0 // pred_check_branch
    %13 = sbr.rel (0) target = $region13
  $region12: #{model_forward.11} parent=0 // pred_region
    _
  $region13: #{model_forward.11} parent=0 // pred_fallthru
    _
  %v15 = vld [vmem:[%s0] sm:$0xf]
  %v16 = vld [vmem:[%s0 + $0x4] sm:$0xf]
  %v17 = vld [vmem:[%s1] sm:$0xf]
  %v18 = vld [vmem:[%s1 + $0x4] sm:$0xf]
  %v19 = vld [vmem:[%s1 + $0x8] sm:$0xf]
  %v20 = vld [vmem:[%s1 + $0xc] sm:$0xf]
  %v21 = vld [vmem:[%s1 + $0x10] sm:$0xf]
  %v22 = vld [vmem:[%s1 + $0x14] sm:$0xf]
  %v23 = vld [vmem:[%s1 + $0x18] sm:$0xf]
  %v24 = vld [vmem:[%s1 + $0x1c] sm:$0xf]
  %v25 = vld [vmem:[%s1 + $0x20] sm:$0xf]
  %v26 = vld [vmem:[%s1 + $0x24] sm:$0xf]
  %v27 = vld [vmem:[%s1 + $0x28] sm:$0xf]
  %v28 = vld [vmem:[%s1 + $0x2c] sm:$0xf]
  %v29 = vld [vmem:[%s1 + $0x30] sm:$0xf]
  %v30 = vld [vmem:[%s1 + $0x34] sm:$0xf]
  %v31 = vld [vmem:[%s1 + $0x38] sm:$0xf]
  %v32 = vld [vmem:[%s1 + $0x3c] sm:$0xf]
  %v33 = vld [vmem:[%s2] sm:$0x1]
  %v35 = vlaneseq
  %v36 = vshrl.u32 %v35, 7
  %v37 = vsub.s32 0, %v36
  %v38 = vrot.slane %v33, %v37
  %v42 = vunpack.c.l.b16 %v15
  %v43 = vunpack.c.l.b16 %v16
  %v44 = vpack.c.b16 %v43, %v42
  %v62 = vunpack.c.l.b16 %v17
  %v63 = vunpack.c.l.b16 %v18
  %v64 = vunpack.c.l.b16 %v19
  %v65 = vunpack.c.l.b16 %v20
  %v66 = vunpack.c.l.b16 %v21
  %v67 = vunpack.c.l.b16 %v22
  %v68 = vunpack.c.l.b16 %v23
  %v69 = vunpack.c.l.b16 %v24
  %v70 = vunpack.c.l.b16 %v25
  %v71 = vunpack.c.l.b16 %v26
  %v72 = vunpack.c.l.b16 %v27
  %v73 = vunpack.c.l.b16 %v28
  %v74 = vunpack.c.l.b16 %v29
  %v75 = vunpack.c.l.b16 %v30
  %v76 = vunpack.c.l.b16 %v31
  %v77 = vunpack.c.l.b16 %v32
  %v78 = vpack.c.b16 %v63, %v62
  %v79 = vpack.c.b16 %v65, %v64
  %v80 = vpack.c.b16 %v67, %v66
  %v81 = vpack.c.b16 %v69, %v68
  %v82 = vpack.c.b16 %v71, %v70
  %v83 = vpack.c.b16 %v73, %v72
  %v84 = vpack.c.b16 %v75, %v74
  %v85 = vpack.c.b16 %v77, %v76
  %94 = vmatprep.subr.bf16.mxu0 0
  %95 = vmatpush1.bf16.msra.mxu0 %v78
  %96 = vmatprep.subr.bf16.mxu0 0
  %97 = vmatpush1.bf16.msra.mxu0 %v79
  %98 = vmatprep.subr.bf16.mxu0 0
  %99 = vmatpush1.bf16.msra.mxu0 %v80
  %100 = vmatprep.subr.bf16.mxu0 0
  %101 = vmatpush1.bf16.msra.mxu0 %v81
  %102 = vmatprep.subr.bf16.mxu0 0
  %103 = vmatpush1.bf16.msra.mxu0 %v82
  %104 = vmatprep.subr.bf16.mxu0 0
  %105 = vmatpush1.bf16.msra.mxu0 %v83
  %106 = vmatprep.subr.bf16.mxu0 0
  %107 = vmatpush1.bf16.msra.mxu0 %v84
  %108 = vmatprep.subr.bf16.mxu0 0
  %109 = vmatpush1.bf16.msra.mxu0 %v85
  %110 = vmatprep.subr.bf16.mxu0 0
  %111 = vmatpush1.bf16.msra.mxu0 0
  %112 = vmatprep.subr.bf16.mxu0 0
  %113 = vmatpush1.bf16.msra.mxu0 0
  %114 = vmatprep.subr.bf16.mxu0 0
  %115 = vmatpush1.bf16.msra.mxu0 0
  %116 = vmatprep.subr.bf16.mxu0 0
  %117 = vmatpush1.bf16.msra.mxu0 0
  %118 = vmatprep.subr.bf16.mxu0 0
  %119 = vmatpush1.bf16.msra.mxu0 0
  %120 = vmatprep.subr.bf16.mxu0 0
  %121 = vmatpush1.bf16.msra.mxu0 0
  %122 = vmatprep.subr.bf16.mxu0 0
  %123 = vmatpush1.bf16.msra.mxu0 0
  %124 = vmatprep.subr.bf16.mxu0 0
  %125 = vmatpush1.bf16.msra.mxu0 0
  %126 = vmatprep.mubr.bf16.mxu0 0
  %127 = vmatmul.mubr.bf16.gmra.mrb[0].mxu0 %v44
  %v128 = vpop.f32.mrb[0].mxu0
  %v129 = vadd.f32 %v38, %v128
  %v130 = vpop.f32.mrb[0].mxu0
  %v131 = vpop.f32.mrb[0].mxu0
  %v132 = vadd.f32 %v38, %v131
  %v133 = vpop.f32.mrb[0].mxu0
  %134 = vdwg.mxu0
  %vm135 = vcmp.gt.f32.partialorder %v129, 0.0
  %vm136 = vcmp.gt.f32.partialorder %v132, 0.0
  %v137 = vmul.f32 %v129, 0.1
  %v138 = vmul.f32 %v132, 0.1
  %v139 = vsel %vm135, %v129, %v137
  %v140 = vsel %vm136, %v132, %v138
  %v141 = vpack.c.bf16 %v140, %v139
  %v143 = vunpack.c.l.b16 %v141
  %v144 = vunpack.c.h.b16 %v141
  %v145 = vpack.c.b16 %v143, %v143
  %v146 = vpack.c.b16 %v144, %v144
  %149 = vst [vmem:[%s3] sm:$0xf] %v145
  %150 = vst [vmem:[%s3 + $0x4] sm:$0xf] %v146
  // Predicated region
  $region14: #{model_forward.11} parent=0 // pred_check
    _
  $region15: #{model_forward.11} parent=0 // pred_check_branch
    %152 = sbr.rel (0) target = $region17
  $region16: #{model_forward.11} parent=0 // pred_region
    _
  $region17: #{model_forward.11} parent=0 // pred_fallthru
    _
  // Predicated region
  $region18: #{model_forward.11} parent=0 // pred_check
    _
  $region19: #{model_forward.11} parent=0 // pred_check_branch
    %154 = sbr.rel (0) target = $region21
  $region20: #{model_forward.11} parent=0 // pred_region
    _
  $region21: #{model_forward.11} parent=0 // pred_fallthru
    _

// kernel: model_forward.13
$region0: #{model_forward.13}
  #allocation0 [shape = 'u32[]', space=smem, size = 0x4, offset = 0x4, fixed_abs, tag = 'smem constant byte address 0x4 - core index']
  #allocation1 [shape = 'u32[144,128]{1,0:T(1,128)}', space=vmem, size = 0x12000, scoped, tag = 'internal scratch']
  %s0 = inlined_call_operand.vmem [shape: bf16[2,128,128], index: 0, kind: input, shape index: {}]
  %s1 = inlined_call_operand.vmem [shape: bf16[2,128,128], index: 1, kind: input, shape index: {}]
  %s2 = inlined_call_operand.vmem [shape: f32[2,128,128], index: 2, kind: output, shape index: {}]
  %s3 = sld [smem:[#allocation0]]
  $region41: #{model_forward.13} parent=0
    _
  %s5 = ssub.s32 1, %s3
  %s6 = scalar_select 0, %s5, %s3
  loop: start=0, step=1, limit=4
  $region2: #{model_forward.13} parent=0 // loop_pre_header
    _
  $region3: #{model_forward.13} parent=0 // loop_header
    %s8 = sphi 0, %s12
    %p9 = scmp.ge.s32.totalorder %s8, 4
    %s18 = sphi 0, %s20
    %s21 = sphi 0, %s18
    %s22 = sphi 0, %s21
    %s38 = sphi 0, %s22
    %s44 = sphi 0, %s46
    %s47 = sphi 0, %s44
    %s48 = sphi 0, %s47
    %s64 = sphi 0, %s48
    %s70 = sphi 0, %s72
    %s73 = sphi 0, %s70
    %s74 = sphi 0, %s73
    %s90 = sphi 0, %s74
  $region4: #{model_forward.13} parent=0 // loop_header_branch
    %11 = sbr.rel (%p9) target = $region8
  $region5: #{model_forward.13} parent=0 // loop_body
    %s13 = ssub.s32 %s8, 1
    %s14 = ssub.s32 %s8, 2
    %s15 = sadd.s32 %s8, 1
    %s16 = ssub.s32 %s8, %s15
    %p17 = scmp.eq.s32.totalorder %s16, 0
    %s19 = sadd.s32 %s18, 1
    %s20 = scalar_select %p17, %s18, %s19
    %p23 = pneg %p17
    %p24 = scmp.eq.s32.totalorder %s8, 1
    %p25 = por %p23, %p24
    %p26 = scmp.ne.s32.totalorder %s18, %s21
    %p27 = scmp.eq.s32.totalorder %s8, 0
    %p28 = por %p26, %p27
    %p29 = scmp.ne.s32.totalorder %s18, %s21
    %p30 = scmp.eq.s32.totalorder %s13, 1
    %p31 = por %p29, %p30
    %p32 = scmp.ne.s32.totalorder %s21, %s22
    %p33 = scmp.eq.s32.totalorder %s13, 0
    %p34 = por %p32, %p33
    %p35 = scmp.ne.s32.totalorder %s21, %s22
    %p36 = scmp.eq.s32.totalorder %s14, 1
    %p37 = por %p35, %p36
    %p39 = scmp.ne.s32.totalorder %s22, %s38
    %p40 = scmp.eq.s32.totalorder %s14, 0
    %p41 = por %p39, %p40
    %s42 = ssub.s32 %s8, %s15
    %p43 = scmp.eq.s32.totalorder %s42, 0
    %s45 = sadd.s32 %s44, 1
    %s46 = scalar_select %p43, %s44, %s45
    %p49 = pneg %p43
    %p50 = scmp.eq.s32.totalorder %s8, 1
    %p51 = por %p49, %p50
    %p52 = scmp.ne.s32.totalorder %s44, %s47
    %p53 = scmp.eq.s32.totalorder %s8, 0
    %p54 = por %p52, %p53
    %p55 = scmp.ne.s32.totalorder %s44, %s47
    %p56 = scmp.eq.s32.totalorder %s13, 1
    %p57 = por %p55, %p56
    %p58 = scmp.ne.s32.totalorder %s47, %s48
    %p59 = scmp.eq.s32.totalorder %s13, 0
    %p60 = por %p58, %p59
    %p61 = scmp.ne.s32.totalorder %s47, %s48
    %p62 = scmp.eq.s32.totalorder %s14, 1
    %p63 = por %p61, %p62
    %p65 = scmp.ne.s32.totalorder %s48, %s64
    %p66 = scmp.eq.s32.totalorder %s14, 0
    %p67 = por %p65, %p66
    %s68 = ssub.s32 %s8, %s15
    %p69 = scmp.eq.s32.totalorder %s68, 0
    %s71 = sadd.s32 %s70, 1
    %s72 = scalar_select %p69, %s70, %s71
    %p75 = pneg %p69
    %p76 = scmp.eq.s32.totalorder %s8, 1
    %p77 = por %p75, %p76
    %p78 = scmp.ne.s32.totalorder %s70, %s73
    %p79 = scmp.eq.s32.totalorder %s8, 0
    %p80 = por %p78, %p79
    %p81 = scmp.ne.s32.totalorder %s70, %s73
    %p82 = scmp.eq.s32.totalorder %s13, 1
    %p83 = por %p81, %p82
    %p84 = scmp.ne.s32.totalorder %s73, %s74
    %p85 = scmp.eq.s32.totalorder %s13, 0
    %p86 = por %p84, %p85
    %p87 = scmp.ne.s32.totalorder %s73, %s74
    %p88 = scmp.eq.s32.totalorder %s14, 1
    %p89 = por %p87, %p88
    %p91 = scmp.ne.s32.totalorder %s74, %s90
    %p92 = scmp.eq.s32.totalorder %s14, 0
    %p93 = por %p91, %p92
    %p94 = scmp.le.s32.totalorder 1, %s8
    %p95 = scmp.lt.s32.totalorder %s8, 3
    %p96 = pnand %p94, %p95
    %p97 = pneg %p96
    // Predicated region
    $region9: #{model_forward.13} parent=5 // pred_check
      _
    $region10: #{model_forward.13} parent=5 // pred_check_branch
      %99 = sbr.rel (%p96) target = $region12
    $region11: #{model_forward.13} parent=5 // pred_region
      %s100 = ssub.s32 %s8, 1
    $region12: #{model_forward.13} parent=5 // pred_fallthru
      _
    %p101 = scmp.lt.s32.totalorder %s8, 2
    // Predicated region
    $region13: #{model_forward.13} parent=5 // pred_check
      %p102 = pneg %p101
    $region14: #{model_forward.13} parent=5 // pred_check_branch
      %104 = sbr.rel (%p102) target = $region16
    $region15: #{model_forward.13} parent=5 // pred_region
      // Predicated region
      $region17: #{model_forward.13} parent=15 // pred_check
        %p105 = pneg %p28
      $region18: #{model_forward.13} parent=15 // pred_check_branch
        %107 = sbr.rel (%p105) target = $region20
      $region19: #{model_forward.13} parent=15 // pred_region
        %p108 = scmp.lt.s32.totalorder %s8, 1
        %s109 = scalar_select %p108, %s8, 1
        %s110 = smul.addr %s109, 16
        %s111 = smul.addr %s110, 4
        %s112 = scalar_lea.vmem %s0, %s111
      $region20: #{model_forward.13} parent=15 // pred_fallthru
        _
      // Predicated region
      $region21: #{model_forward.13} parent=15 // pred_check
        %p113 = pneg %p54
      $region22: #{model_forward.13} parent=15 // pred_check_branch
        %115 = sbr.rel (%p113) target = $region24
      $region23: #{model_forward.13} parent=15 // pred_region
        %p116 = scmp.lt.s32.totalorder %s8, 1
        %s117 = scalar_select %p116, %s8, 1
        %s118 = smul.addr %s117, 16
        %s119 = smul.addr %s118, 4
        %s120 = scalar_lea.vmem %s1, %s119
      $region24: #{model_forward.13} parent=15 // pred_fallthru
        _
    $region16: #{model_forward.13} parent=5 // pred_fallthru
      _
    %p121 = scmp.le.s32.totalorder 1, %s8
    %p122 = scmp.lt.s32.totalorder %s8, 3
    %p123 = pnand %p121, %p122
    %p124 = pneg %p123
    // Predicated region
    $region25: #{model_forward.13} parent=5 // pred_check
      _
    $region26: #{model_forward.13} parent=5 // pred_check_branch
      %126 = sbr.rel (%p123) target = $region28
    $region27: #{model_forward.13} parent=5 // pred_region
      %s127 = ssub.s32 %s8, 1
      %p128 = scmp.lt.s32.totalorder %s13, 1
      %s129 = scalar_select %p128, %s13, 1
      %s130 = smul.addr %s129, 16
      %s131 = smul.addr %s130, 4
      %s132 = scalar_lea.vmem %s0, %s131
      %p133 = pneg %p34
      %p134 = pneg %p31
      %p135 = scmp.lt.s32.totalorder %s13, 1
      %s136 = scalar_select %p135, %s13, 1
      %s137 = smul.addr %s136, 16
      %s138 = smul.addr %s137, 4
      %s139 = scalar_lea.vmem %s1, %s138
      %p140 = pneg %p60
      %p141 = pneg %p57
      %p142 = pneg %p86
      %p143 = pneg %p83
      %p144 = scmp.lt.s32.totalorder %s13, 1
      %s145 = scalar_select %p144, %s13, 1
      %s146 = smul.addr %s145, 16
      %s147 = smul.addr %s146, 8
      %s148 = scalar_lea.vmem %s2, %s147
      %p149 = scmp.lt.s32.totalorder %s13, 1
      %s150 = scalar_select %p149, %s13, 1
      %s151 = smul.addr %s150, 16
      %s152 = smul.addr %s151, 4
      %s153 = scalar_lea.vmem %s0, %s152
      %p154 = scmp.lt.s32.totalorder %s13, 1
      %s155 = scalar_select %p154, %s13, 1
      %s156 = smul.addr %s155, 16
      %s157 = smul.addr %s156, 4
      %s158 = scalar_lea.vmem %s1, %s157
      %p159 = scmp.lt.s32.totalorder %s13, 1
      %s160 = scalar_select %p159, %s13, 1
      %s161 = smul.addr %s160, 16
      %s162 = smul.addr %s161, 8
      %s163 = scalar_lea.vmem %s2, %s162
      %v165 = vld [vmem:[%s153] sm:$0xf]
      %v166 = vld [vmem:[%s153 + $0x4] sm:$0xf]
      %v167 = vld [vmem:[%s153 + $0x8] sm:$0xf]
      %v168 = vld [vmem:[%s153 + $0xc] sm:$0xf]
      %v169 = vld [vmem:[%s153 + $0x10] sm:$0xf]
      %v170 = vld [vmem:[%s153 + $0x14] sm:$0xf]
      %v171 = vld [vmem:[%s153 + $0x18] sm:$0xf]
      %v172 = vld [vmem:[%s153 + $0x1c] sm:$0xf]
      %v173 = vld [vmem:[%s153 + $0x20] sm:$0xf]
      %v174 = vld [vmem:[%s153 + $0x24] sm:$0xf]
      %v175 = vld [vmem:[%s153 + $0x28] sm:$0xf]
      %v176 = vld [vmem:[%s153 + $0x2c] sm:$0xf]
      %v177 = vld [vmem:[%s153 + $0x30] sm:$0xf]
      %v178 = vld [vmem:[%s153 + $0x34] sm:$0xf]
      %v179 = vld [vmem:[%s153 + $0x38] sm:$0xf]
      %v180 = vld [vmem:[%s153 + $0x3c] sm:$0xf]
      %v181 = vld [vmem:[%s158] sm:$0xf]
      %v182 = vld [vmem:[%s158 + $0x4] sm:$0xf]
      %v183 = vld [vmem:[%s158 + $0x8] sm:$0xf]
      %v184 = vld [vmem:[%s158 + $0xc] sm:$0xf]
      %v185 = vld [vmem:[%s158 + $0x10] sm:$0xf]
      %v186 = vld [vmem:[%s158 + $0x14] sm:$0xf]
      %v187 = vld [vmem:[%s158 + $0x18] sm:$0xf]
      %v188 = vld [vmem:[%s158 + $0x1c] sm:$0xf]
      %v189 = vld [vmem:[%s158 + $0x20] sm:$0xf]
      %v190 = vld [vmem:[%s158 + $0x24] sm:$0xf]
      %v191 = vld [vmem:[%s158 + $0x28] sm:$0xf]
      %v192 = vld [vmem:[%s158 + $0x2c] sm:$0xf]
      %v193 = vld [vmem:[%s158 + $0x30] sm:$0xf]
      %v194 = vld [vmem:[%s158 + $0x34] sm:$0xf]
      %v195 = vld [vmem:[%s158 + $0x38] sm:$0xf]
      %v196 = vld [vmem:[%s158 + $0x3c] sm:$0xf]
      %v213 = vunpack.c.l.b16 %v165
      %v214 = vunpack.c.l.b16 %v166
      %v215 = vunpack.c.l.b16 %v167
      %v216 = vunpack.c.l.b16 %v168
      %v217 = vunpack.c.l.b16 %v169
      %v218 = vunpack.c.l.b16 %v170
      %v219 = vunpack.c.l.b16 %v171
      %v220 = vunpack.c.l.b16 %v172
      %v221 = vunpack.c.l.b16 %v173
      %v222 = vunpack.c.l.b16 %v174
      %v223 = vunpack.c.l.b16 %v175
      %v224 = vunpack.c.l.b16 %v176
      %v225 = vunpack.c.l.b16 %v177
      %v226 = vunpack.c.l.b16 %v178
      %v227 = vunpack.c.l.b16 %v179
      %v228 = vunpack.c.l.b16 %v180
      %v229 = vpack.c.b16 %v214, %v213
      %v230 = vpack.c.b16 %v216, %v215
      %v231 = vpack.c.b16 %v218, %v217
      %v232 = vpack.c.b16 %v220, %v219
      %v233 = vpack.c.b16 %v222, %v221
      %v234 = vpack.c.b16 %v224, %v223
      %v235 = vpack.c.b16 %v226, %v225
      %v236 = vpack.c.b16 %v228, %v227
      %v261 = vunpack.c.l.b16 %v181
      %v262 = vunpack.c.l.b16 %v182
      %v263 = vunpack.c.l.b16 %v183
      %v264 = vunpack.c.l.b16 %v184
      %v265 = vunpack.c.l.b16 %v185
      %v266 = vunpack.c.l.b16 %v186
      %v267 = vunpack.c.l.b16 %v187
      %v268 = vunpack.c.l.b16 %v188
      %v269 = vunpack.c.l.b16 %v189
      %v270 = vunpack.c.l.b16 %v190
      %v271 = vunpack.c.l.b16 %v191
      %v272 = vunpack.c.l.b16 %v192
      %v273 = vunpack.c.l.b16 %v193
      %v274 = vunpack.c.l.b16 %v194
      %v275 = vunpack.c.l.b16 %v195
      %v276 = vunpack.c.l.b16 %v196
      %v277 = vpack.c.b16 %v262, %v261
      %v278 = vpack.c.b16 %v264, %v263
      %v279 = vpack.c.b16 %v266, %v265
      %v280 = vpack.c.b16 %v268, %v267
      %v281 = vpack.c.b16 %v270, %v269
      %v282 = vpack.c.b16 %v272, %v271
      %v283 = vpack.c.b16 %v274, %v273
      %v284 = vpack.c.b16 %v276, %v275
      %293 = vmatprep.subr.bf16.mxu0 0
      %294 = vmatpush1.bf16.xpose.msra.mxu0 %v277
      %295 = vmatprep.subr.bf16.mxu0 0
      %296 = vmatpush1.bf16.xpose.msra.mxu0 %v278
      %297 = vmatprep.subr.bf16.mxu0 0
      %298 = vmatpush1.bf16.xpose.msra.mxu0 %v279
      %299 = vmatprep.subr.bf16.mxu0 0
      %300 = vmatpush1.bf16.xpose.msra.mxu0 %v280
      %301 = vmatprep.subr.bf16.mxu0 0
      %302 = vmatpush1.bf16.xpose.msra.mxu0 %v281
      %303 = vmatprep.subr.bf16.mxu0 0
      %304 = vmatpush1.bf16.xpose.msra.mxu0 %v282
      %305 = vmatprep.subr.bf16.mxu0 0
      %306 = vmatpush1.bf16.xpose.msra.mxu0 %v283
      %307 = vmatprep.subr.bf16.mxu0 0
      %308 = vmatpush1.bf16.xpose.msra.mxu0 %v284
      %309 = vmatprep.subr.bf16.mxu0 0
      %310 = vmatpush1.bf16.xpose.msra.mxu0 0
      %311 = vmatprep.subr.bf16.mxu0 0
      %312 = vmatpush1.bf16.xpose.msra.mxu0 0
      %313 = vmatprep.subr.bf16.mxu0 0
      %314 = vmatpush1.bf16.xpose.msra.mxu0 0
      %315 = vmatprep.subr.bf16.mxu0 0
      %316 = vmatpush1.bf16.xpose.msra.mxu0 0
      %317 = vmatprep.subr.bf16.mxu0 0
      %318 = vmatpush1.bf16.xpose.msra.mxu0 0
      %319 = vmatprep.subr.bf16.mxu0 0
      %320 = vmatpush1.bf16.xpose.msra.mxu0 0
      %321 = vmatprep.subr.bf16.mxu0 0
      %322 = vmatpush1.bf16.xpose.msra.mxu0 0
      %323 = vmatprep.subr.bf16.mxu0 0
      %324 = vmatpush1.bf16.xpose.msra.mxu0 0
      %325 = vmatprep.mubr.bf16.mxu0 0
      %326 = vmatmul.mubr.bf16.gmra.mrb[0].mxu0 %v229
      %v327 = vpop.f32.mrb[0].mxu0
      %v328 = vadd.f32 0.0, %v327
      %v329 = vpop.f32.mrb[0].mxu0
      %v330 = vpop.f32.mrb[0].mxu0
      %v331 = vadd.f32 0.0, %v330
      %v332 = vpop.f32.mrb[0].mxu0
      %333 = vmatprep.mubr.bf16.mxu0 0
      %334 = vmatmul.mubr.bf16.gmra.mrb[0].mxu0 %v230
      %v335 = vpop.f32.mrb[0].mxu0
      %v336 = vadd.f32 0.0, %v335
      %v337 = vpop.f32.mrb[0].mxu0
      %v338 = vpop.f32.mrb[0].mxu0
      %v339 = vadd.f32 0.0, %v338
      %v340 = vpop.f32.mrb[0].mxu0
      %341 = vmatprep.mubr.bf16.mxu0 0
      %342 = vmatmul.mubr.bf16.gmra.mrb[0].mxu0 %v231
      %v343 = vpop.f32.mrb[0].mxu0
      %v344 = vadd.f32 0.0, %v343
      %v345 = vpop.f32.mrb[0].mxu0
      %v346 = vpop.f32.mrb[0].mxu0
      %v347 = vadd.f32 0.0, %v346
      %v348 = vpop.f32.mrb[0].mxu0
      %349 = vmatprep.mubr.bf16.mxu0 0
      %350 = vmatmul.mubr.bf16.gmra.mrb[0].mxu0 %v232
      %v351 = vpop.f32.mrb[0].mxu0
      %v352 = vadd.f32 0.0, %v351
      %v353 = vpop.f32.mrb[0].mxu0
      %v354 = vpop.f32.mrb[0].mxu0
      %v355 = vadd.f32 0.0, %v354
      %v356 = vpop.f32.mrb[0].mxu0
      %357 = vmatprep.mubr.bf16.mxu0 0
      %358 = vmatmul.mubr.bf16.gmra.mrb[0].mxu0 %v233
      %v359 = vpop.f32.mrb[0].mxu0
      %v360 = vadd.f32 0.0, %v359
      %v361 = vpop.f32.mrb[0].mxu0
      %v362 = vpop.f32.mrb[0].mxu0
      %v363 = vadd.f32 0.0, %v362
      %v364 = vpop.f32.mrb[0].mxu0
      %365 = vmatprep.mubr.bf16.mxu0 0
      %366 = vmatmul.mubr.bf16.gmra.mrb[0].mxu0 %v234
      %v367 = vpop.f32.mrb[0].mxu0
      %v368 = vadd.f32 0.0, %v367
      %v369 = vpop.f32.mrb[0].mxu0
      %v370 = vpop.f32.mrb[0].mxu0
      %v371 = vadd.f32 0.0, %v370
      %v372 = vpop.f32.mrb[0].mxu0
      %373 = vmatprep.mubr.bf16.mxu0 0
      %374 = vmatmul.mubr.bf16.gmra.mrb[0].mxu0 %v235
      %v375 = vpop.f32.mrb[0].mxu0
      %v376 = vadd.f32 0.0, %v375
      %v377 = vpop.f32.mrb[0].mxu0
      %v378 = vpop.f32.mrb[0].mxu0
      %v379 = vadd.f32 0.0, %v378
      %v380 = vpop.f32.mrb[0].mxu0
      %381 = vmatprep.mubr.bf16.mxu0 0
      %382 = vmatmul.mubr.bf16.gmra.mrb[0].mxu0 %v236
      %v383 = vpop.f32.mrb[0].mxu0
      %v384 = vadd.f32 0.0, %v383
      %v385 = vpop.f32.mrb[0].mxu0
      %v386 = vpop.f32.mrb[0].mxu0
      %v387 = vadd.f32 0.0, %v386
      %v388 = vpop.f32.mrb[0].mxu0
      %389 = vdwg.mxu0
      %390 = vst [vmem:[%s163] sm:$0xff] %v328
      %391 = vst [vmem:[%s163 + $0x8] sm:$0xff] %v331
      %392 = vst [vmem:[%s163 + $0x10] sm:$0xff] %v336
      %393 = vst [vmem:[%s163 + $0x18] sm:$0xff] %v339
      %394 = vst [vmem:[%s163 + $0x20] sm:$0xff] %v344
      %395 = vst [vmem:[%s163 + $0x28] sm:$0xff] %v347
      %396 = vst [vmem:[%s163 + $0x30] sm:$0xff] %v352
      %397 = vst [vmem:[%s163 + $0x38] sm:$0xff] %v355
      %398 = vst [vmem:[%s163 + $0x40] sm:$0xff] %v360
      %399 = vst [vmem:[%s163 + $0x48] sm:$0xff] %v363
      %400 = vst [vmem:[%s163 + $0x50] sm:$0xff] %v368
      %401 = vst [vmem:[%s163 + $0x58] sm:$0xff] %v371
      %402 = vst [vmem:[%s163 + $0x60] sm:$0xff] %v376
      %403 = vst [vmem:[%s163 + $0x68] sm:$0xff] %v379
      %404 = vst [vmem:[%s163 + $0x70] sm:$0xff] %v384
      %405 = vst [vmem:[%s163 + $0x78] sm:$0xff] %v387
      %p406 = scmp.lt.s32.totalorder %s13, 1
      %s407 = scalar_select %p406, %s13, 1
      %s408 = smul.addr %s407, 16
      %s409 = smul.addr %s408, 8
      %s410 = scalar_lea.vmem %s2, %s409
      // Predicated region
      $region29: #{model_forward.13} parent=27 // pred_check
        %p411 = pneg %p83
      $region30: #{model_forward.13} parent=27 // pred_check_branch
        %413 = sbr.rel (%p411) target = $region32
      $region31: #{model_forward.13} parent=27 // pred_region
        _
      $region32: #{model_forward.13} parent=27 // pred_fallthru
        _
    $region28: #{model_forward.13} parent=5 // pred_fallthru
      _
    %p414 = scmp.le.s32.totalorder 2, %s8
    // Predicated region
    $region33: #{model_forward.13} parent=5 // pred_check
      %p415 = pneg %p414
    $region34: #{model_forward.13} parent=5 // pred_check_branch
      %417 = sbr.rel (%p415) target = $region36
    $region35: #{model_forward.13} parent=5 // pred_region
      %s418 = ssub.s32 %s8, 2
      // Predicated region
      $region37: #{model_forward.13} parent=35 // pred_check
        %p419 = pneg %p89
      $region38: #{model_forward.13} parent=35 // pred_check_branch
        %421 = sbr.rel (%p419) target = $region40
      $region39: #{model_forward.13} parent=35 // pred_region
        %p422 = scmp.lt.s32.totalorder %s14, 1
        %s423 = scalar_select %p422, %s14, 1
        %s424 = smul.addr %s423, 16
        %s425 = smul.addr %s424, 8
        %s426 = scalar_lea.vmem %s2, %s425
      $region40: #{model_forward.13} parent=35 // pred_fallthru
        _
    $region36: #{model_forward.13} parent=5 // pred_fallthru
      _
  $region6: #{model_forward.13} parent=0 // loop_footer
    %s12 = sadd.s32 1, %s8
  $region7: #{model_forward.13} parent=0 // loop_footer_branch
    %7 = sbr.rel target = $region3
  $region8: #{model_forward.13} parent=0 // loop_exit
    _

// kernel: model_forward.12
$region0: #{model_forward.12}
  #allocation0 [shape = 'u32[]', space=smem, size = 0x4, offset = 0x4, fixed_abs, tag = 'smem constant byte address 0x4 - core index']
  #allocation1 [shape = 'u32[144,128]{1,0:T(1,128)}', space=vmem, size = 0x12000, scoped, tag = 'internal scratch']
  %s0 = inlined_call_operand.vmem [shape: bf16[16,128], index: 0, kind: input, shape index: {}]
  %s1 = inlined_call_operand.vmem [shape: bf16[128,128], index: 1, kind: input, shape index: {}]
  %s2 = inlined_call_operand.vmem [shape: f32[1,128], index: 2, kind: input, shape index: {}]
  %s3 = inlined_call_operand.vmem [shape: bf16[16,128], index: 3, kind: output, shape index: {}]
  %s4 = sld [smem:[#allocation0]]
  $region22: #{model_forward.12} parent=0
    _
  %s6 = ssub.s32 1, %s4
  %s7 = scalar_select 0, %s6, %s4
  // Predicated region
  $region2: #{model_forward.12} parent=0 // pred_check
    _
  $region3: #{model_forward.12} parent=0 // pred_check_branch
    %9 = sbr.rel (0) target = $region5
  $region4: #{model_forward.12} parent=0 // pred_region
    _
  $region5: #{model_forward.12} parent=0 // pred_fallthru
    _
  // Predicated region
  $region6: #{model_forward.12} parent=0 // pred_check
    _
  $region7: #{model_forward.12} parent=0 // pred_check_branch
    %11 = sbr.rel (0) target = $region9
  $region8: #{model_forward.12} parent=0 // pred_region
    _
  $region9: #{model_forward.12} parent=0 // pred_fallthru
    _
  // Predicated region
  $region10: #{model_forward.12} parent=0 // pred_check
    _
  $region11: #{model_forward.12} parent=0 // pred_check_branch
    %13 = sbr.rel (0) target = $region13
  $region12: #{model_forward.12} parent=0 // pred_region
    _
  $region13: #{model_forward.12} parent=0 // pred_fallthru
    _
  %v15 = vld [vmem:[%s0] sm:$0xf]
  %v16 = vld [vmem:[%s0 + $0x4] sm:$0xf]
  %v17 = vld [vmem:[%s1] sm:$0xf]
  %v18 = vld [vmem:[%s1 + $0x4] sm:$0xf]
  %v19 = vld [vmem:[%s1 + $0x8] sm:$0xf]
  %v20 = vld [vmem:[%s1 + $0xc] sm:$0xf]
  %v21 = vld [vmem:[%s1 + $0x10] sm:$0xf]
  %v22 = vld [vmem:[%s1 + $0x14] sm:$0xf]
  %v23 = vld [vmem:[%s1 + $0x18] sm:$0xf]
  %v24 = vld [vmem:[%s1 + $0x1c] sm:$0xf]
  %v25 = vld [vmem:[%s1 + $0x20] sm:$0xf]
  %v26 = vld [vmem:[%s1 + $0x24] sm:$0xf]
  %v27 = vld [vmem:[%s1 + $0x28] sm:$0xf]
  %v28 = vld [vmem:[%s1 + $0x2c] sm:$0xf]
  %v29 = vld [vmem:[%s1 + $0x30] sm:$0xf]
  %v30 = vld [vmem:[%s1 + $0x34] sm:$0xf]
  %v31 = vld [vmem:[%s1 + $0x38] sm:$0xf]
  %v32 = vld [vmem:[%s1 + $0x3c] sm:$0xf]
  %v33 = vld [vmem:[%s2] sm:$0x1]
  %v35 = vlaneseq
  %v36 = vshrl.u32 %v35, 7
  %v37 = vsub.s32 0, %v36
  %v38 = vrot.slane %v33, %v37
  %v42 = vunpack.c.l.b16 %v15
  %v43 = vunpack.c.l.b16 %v16
  %v44 = vpack.c.b16 %v43, %v42
  %v62 = vunpack.c.l.b16 %v17
  %v63 = vunpack.c.l.b16 %v18
  %v64 = vunpack.c.l.b16 %v19
  %v65 = vunpack.c.l.b16 %v20
  %v66 = vunpack.c.l.b16 %v21
  %v67 = vunpack.c.l.b16 %v22
  %v68 = vunpack.c.l.b16 %v23
  %v69 = vunpack.c.l.b16 %v24
  %v70 = vunpack.c.l.b16 %v25
  %v71 = vunpack.c.l.b16 %v26
  %v72 = vunpack.c.l.b16 %v27
  %v73 = vunpack.c.l.b16 %v28
  %v74 = vunpack.c.l.b16 %v29
  %v75 = vunpack.c.l.b16 %v30
  %v76 = vunpack.c.l.b16 %v31
  %v77 = vunpack.c.l.b16 %v32
  %v78 = vpack.c.b16 %v63, %v62
  %v79 = vpack.c.b16 %v65, %v64
  %v80 = vpack.c.b16 %v67, %v66
  %v81 = vpack.c.b16 %v69, %v68
  %v82 = vpack.c.b16 %v71, %v70
  %v83 = vpack.c.b16 %v73, %v72
  %v84 = vpack.c.b16 %v75, %v74
  %v85 = vpack.c.b16 %v77, %v76
  %94 = vmatprep.subr.bf16.mxu0 0
  %95 = vmatpush1.bf16.msra.mxu0 %v78
  %96 = vmatprep.subr.bf16.mxu0 0
  %97 = vmatpush1.bf16.msra.mxu0 %v79
  %98 = vmatprep.subr.bf16.mxu0 0
  %99 = vmatpush1.bf16.msra.mxu0 %v80
  %100 = vmatprep.subr.bf16.mxu0 0
  %101 = vmatpush1.bf16.msra.mxu0 %v81
  %102 = vmatprep.subr.bf16.mxu0 0
  %103 = vmatpush1.bf16.msra.mxu0 %v82
  %104 = vmatprep.subr.bf16.mxu0 0
  %105 = vmatpush1.bf16.msra.mxu0 %v83
  %106 = vmatprep.subr.bf16.mxu0 0
  %107 = vmatpush1.bf16.msra.mxu0 %v84
  %108 = vmatprep.subr.bf16.mxu0 0
  %109 = vmatpush1.bf16.msra.mxu0 %v85
  %110 = vmatprep.subr.bf16.mxu0 0
  %111 = vmatpush1.bf16.msra.mxu0 0
  %112 = vmatprep.subr.bf16.mxu0 0
  %113 = vmatpush1.bf16.msra.mxu0 0
  %114 = vmatprep.subr.bf16.mxu0 0
  %115 = vmatpush1.bf16.msra.mxu0 0
  %116 = vmatprep.subr.bf16.mxu0 0
  %117 = vmatpush1.bf16.msra.mxu0 0
  %118 = vmatprep.subr.bf16.mxu0 0
  %119 = vmatpush1.bf16.msra.mxu0 0
  %120 = vmatprep.subr.bf16.mxu0 0
  %121 = vmatpush1.bf16.msra.mxu0 0
  %122 = vmatprep.subr.bf16.mxu0 0
  %123 = vmatpush1.bf16.msra.mxu0 0
  %124 = vmatprep.subr.bf16.mxu0 0
  %125 = vmatpush1.bf16.msra.mxu0 0
  %126 = vmatprep.mubr.bf16.mxu0 0
  %127 = vmatmul.mubr.bf16.gmra.mrb[0].mxu0 %v44
  %v128 = vpop.f32.mrb[0].mxu0
  %v129 = vadd.f32 %v38, %v128
  %v130 = vpop.f32.mrb[0].mxu0
  %v131 = vpop.f32.mrb[0].mxu0
  %v132 = vadd.f32 %v38, %v131
  %v133 = vpop.f32.mrb[0].mxu0
  %134 = vdwg.mxu0
  %v135 = vpack.c.bf16 %v132, %v129
  %v137 = vunpack.c.l.b16 %v135
  %v138 = vunpack.c.h.b16 %v135
  %v139 = vpack.c.b16 %v137, %v137
  %v140 = vpack.c.b16 %v138, %v138
  %143 = vst [vmem:[%s3] sm:$0xf] %v139
  %144 = vst [vmem:[%s3 + $0x4] sm:$0xf] %v140
  // Predicated region
  $region14: #{model_forward.12} parent=0 // pred_check
    _
  $region15: #{model_forward.12} parent=0 // pred_check_branch
    %146 = sbr.rel (0) target = $region17
  $region16: #{model_forward.12} parent=0 // pred_region
    _
  $region17: #{model_forward.12} parent=0 // pred_fallthru
    _
  // Predicated region
  $region18: #{model_forward.12} parent=0 // pred_check
    _
  $region19: #{model_forward.12} parent=0 // pred_check_branch
    %148 = sbr.rel (0) target = $region21
  $region20: #{model_forward.12} parent=0 // pred_region
    _
  $region21: #{model_forward.12} parent=0 // pred_fallthru
    _

</llo_original>
